<compile_context>
chip_gen: v6e
topology: v6e:2x2x1
jax: 0.10.0
libtpu: 0.0.40
codegen_flags: <defaults>
</compile_context>

<pallas_src>
import jax
import jax.numpy as jnp
from jax.experimental import pallas as pl
from jax.experimental.pallas import tpu as pltpu

HIDDEN = 64


def _gru_kernel(x_ref,
                wih_r_ref, wih_z_ref, wih_n_ref,
                whh_r_ref, whh_z_ref, whh_n_ref,
                b_r_ref, b_z_ref, bih_n_ref, bhh_n_ref,
                wfc_ref, bfc_ref,
                out_ref):
    T, B, N = x_ref.shape
    H = HIDDEN

    # Whole (time-major) sequence resident in VMEM; flatten (T, B, N) -> (T*B, N)
    # so the input projection is one MXU matmul per gate.
    x2d = x_ref[...].reshape(T * B, N)

    # Hoisted input projection (no dependence on h); r/z biases already have
    # b_hh folded in by the wrapper.
    def in_proj(w_ref, b_ref):
        g = jnp.dot(x2d, w_ref[...], preferred_element_type=jnp.float32)
        return g + b_ref[...]                       # (T*B, H)

    gi_r = in_proj(wih_r_ref, b_r_ref)
    gi_z = in_proj(wih_z_ref, b_z_ref)
    gi_n = in_proj(wih_n_ref, bih_n_ref)

    # Recurrent weights / bias loaded once, resident across the loop.
    whh_r = whh_r_ref[...]
    whh_z = whh_z_ref[...]
    whh_n = whh_n_ref[...]
    bhh_n = bhh_n_ref[...]

    h = jnp.zeros((B, H), jnp.float32)
    # Unrolled recurrence (T is small and static); only h @ W_hh remains on
    # the serial critical path. PyTorch GRU gate order: r, z, n.
    for t in range(T):
        lo, hi = t * B, (t + 1) * B                 # static, contiguous rows
        gh_r = jnp.dot(h, whh_r, preferred_element_type=jnp.float32)
        gh_z = jnp.dot(h, whh_z, preferred_element_type=jnp.float32)
        gh_n = jnp.dot(h, whh_n, preferred_element_type=jnp.float32) + bhh_n
        r = jax.nn.sigmoid(gi_r[lo:hi, :] + gh_r)
        z = jax.nn.sigmoid(gi_z[lo:hi, :] + gh_z)
        n = jnp.tanh(gi_n[lo:hi, :] + r * gh_n)
        h = (1.0 - z) * n + z * h

    # Final linear + softmax over the batch axis (torch F.softmax(scores, dim=0)).
    scores = jnp.dot(h, wfc_ref[...],
                     preferred_element_type=jnp.float32) + bfc_ref[...]  # (B, 1)
    m = jnp.max(scores, axis=0, keepdims=True)
    e = jnp.exp(scores - m)
    out_ref[...] = e / jnp.sum(e, axis=0, keepdims=True)


@jax.jit
def recurrent_network_forward(states, params):
    """states: (B, T, N) float32 (batch_first, like PyTorch). Returns (B, 1)."""
    B, T, N = states.shape
    H = HIDDEN
    states = states.astype(jnp.float32)

    w_ih = params["w_ih"]  # (3H, N), gate order r, z, n
    w_hh = params["w_hh"]  # (3H, H)
    b_ih = params["b_ih"]  # (3H,)
    b_hh = params["b_hh"]  # (3H,)

    # Per-gate matrices (tiny weight-side reshuffles, done once by XLA).
    wih = [w_ih[g * H:(g + 1) * H].T for g in range(3)]              # (N, H) each
    whh = [w_hh[g * H:(g + 1) * H].T for g in range(3)]              # (H, H) each
    bih = [b_ih[g * H:(g + 1) * H].reshape(1, H) for g in range(3)]  # (1, H) each
    bhh = [b_hh[g * H:(g + 1) * H].reshape(1, H) for g in range(3)]  # (1, H) each
    # Fold b_hh into the hoisted input-projection bias for the r and z gates;
    # the n-gate bias must stay inside the r-gated recurrent term.
    b_r = bih[0] + bhh[0]
    b_z = bih[1] + bhh[1]
    bih_n = bih[2]
    bhh_n = bhh[2]
    wfc = params["w_fc"].T               # (H, 1)
    bfc = params["b_fc"].reshape(1, 1)   # (1, 1)

    # Time-major layout so per-step gate reads are contiguous leading-axis
    # slices inside the kernel (layout plumbing only, no compute hoisting).
    states_tm = jnp.transpose(states, (1, 0, 2))    # (T, B, N)

    inputs = [states_tm, *wih, *whh, b_r, b_z, bih_n, bhh_n, wfc, bfc]

    def full_spec(a):
        shp = a.shape
        return pl.BlockSpec(shp, lambda *_: (0,) * len(shp))

    return pl.pallas_call(
        _gru_kernel,
        out_shape=jax.ShapeDtypeStruct((B, 1), jnp.float32),
        grid_spec=pltpu.PrefetchScalarGridSpec(
            num_scalar_prefetch=0,
            grid=(1,),  # single invocation; the time loop lives in the kernel
            in_specs=[full_spec(a) for a in inputs],
            out_specs=pl.BlockSpec((B, 1), lambda i: (0, 0)),
        ),
        compiler_params=pltpu.CompilerParams(
            dimension_semantics=("arbitrary",)),
    )(*inputs)


def init_params(key, n):
    """Deterministic init mirroring PyTorch default U(-1/sqrt(H), 1/sqrt(H))."""
    ks = jax.random.split(key, 6)
    bound = 1.0 / jnp.sqrt(jnp.float32(HIDDEN))
    u = lambda k, shape: jax.random.uniform(k, shape, jnp.float32, -bound, bound)
    return {
        "w_ih": u(ks[0], (3 * HIDDEN, n)),
        "w_hh": u(ks[1], (3 * HIDDEN, HIDDEN)),
        "b_ih": u(ks[2], (3 * HIDDEN,)),
        "b_hh": u(ks[3], (3 * HIDDEN,)),
        "w_fc": u(ks[4], (1, HIDDEN)),
        "b_fc": u(ks[5], (1,)),
    }


def _reference_forward(states, params):
    """Pure-JAX GRU reference for correctness check."""
    B, T, N = states.shape
    h = jnp.zeros((B, HIDDEN), jnp.float32)
    for t in range(T):
        x = states[:, t, :]
        gi = x @ params["w_ih"].T + params["b_ih"]
        gh = h @ params["w_hh"].T + params["b_hh"]
        i_r, i_z, i_n = jnp.split(gi, 3, axis=1)
        h_r, h_z, h_n = jnp.split(gh, 3, axis=1)
        r = jax.nn.sigmoid(i_r + h_r)
        z = jax.nn.sigmoid(i_z + h_z)
        nn = jnp.tanh(i_n + r * h_n)
        h = (1.0 - z) * nn + z * h
    scores = h @ params["w_fc"].T + params["b_fc"]
    return jax.nn.softmax(scores, axis=0)


if __name__ == "__main__":
    key = jax.random.PRNGKey(0)
    k_param, k_x = jax.random.split(key)

    B, T, N = 2, 8, 32  # batch, seq, input features
    params = init_params(k_param, N)
    states = jax.random.normal(k_x, (B, T, N), jnp.float32)

    prob = recurrent_network_forward(states, params)
    prob = jax.block_until_ready(prob)

    ref = _reference_forward(states, params)
    assert prob.shape == (B, 1)
    assert jnp.allclose(prob, ref, atol=1e-5, rtol=1e-5), (prob, ref)
    assert jnp.allclose(jnp.sum(prob), 1.0, atol=1e-5)

    print("KERNEL_OK")
</pallas_src>

<mosaic_0001>
module attributes {stable_mosaic.version = 11 : i64} {
  func.func @_gru_kernel(%arg0: i32, %arg1: memref<8x2x32xf32, #tpu.memory_space<vmem>>, %arg2: memref<32x64xf32, #tpu.memory_space<vmem>>, %arg3: memref<32x64xf32, #tpu.memory_space<vmem>>, %arg4: memref<32x64xf32, #tpu.memory_space<vmem>>, %arg5: memref<64x64xf32, #tpu.memory_space<vmem>>, %arg6: memref<64x64xf32, #tpu.memory_space<vmem>>, %arg7: memref<64x64xf32, #tpu.memory_space<vmem>>, %arg8: memref<1x64xf32, #tpu.memory_space<vmem>>, %arg9: memref<1x64xf32, #tpu.memory_space<vmem>>, %arg10: memref<1x64xf32, #tpu.memory_space<vmem>>, %arg11: memref<1x64xf32, #tpu.memory_space<vmem>>, %arg12: memref<64x1xf32, #tpu.memory_space<vmem>>, %arg13: memref<1x1xf32, #tpu.memory_space<vmem>>, %arg14: memref<2x1xf32, #tpu.memory_space<vmem>>) attributes {dimension_semantics = [#tpu.dimension_semantics<arbitrary>], iteration_bounds = array<i64: 1>, scalar_prefetch = 0 : i64, scratch_operands = 0 : i64, tpu.core_type = #tpu.core_type<tc>, window_params = [{pipeline_mode = #tpu.pipeline_mode<synchronous>, transform_indices = @transform_0, window_bounds = array<i64: 8, 2, 32>}, {pipeline_mode = #tpu.pipeline_mode<synchronous>, transform_indices = @transform_1, window_bounds = array<i64: 32, 64>}, {pipeline_mode = #tpu.pipeline_mode<synchronous>, transform_indices = @transform_2, window_bounds = array<i64: 32, 64>}, {pipeline_mode = #tpu.pipeline_mode<synchronous>, transform_indices = @transform_3, window_bounds = array<i64: 32, 64>}, {pipeline_mode = #tpu.pipeline_mode<synchronous>, transform_indices = @transform_4, window_bounds = array<i64: 64, 64>}, {pipeline_mode = #tpu.pipeline_mode<synchronous>, transform_indices = @transform_5, window_bounds = array<i64: 64, 64>}, {pipeline_mode = #tpu.pipeline_mode<synchronous>, transform_indices = @transform_6, window_bounds = array<i64: 64, 64>}, {pipeline_mode = #tpu.pipeline_mode<synchronous>, transform_indices = @transform_7, window_bounds = array<i64: 1, 64>}, {pipeline_mode = #tpu.pipeline_mode<synchronous>, transform_indices = @transform_8, window_bounds = array<i64: 1, 64>}, {pipeline_mode = #tpu.pipeline_mode<synchronous>, transform_indices = @transform_9, window_bounds = array<i64: 1, 64>}, {pipeline_mode = #tpu.pipeline_mode<synchronous>, transform_indices = @transform_10, window_bounds = array<i64: 1, 64>}, {pipeline_mode = #tpu.pipeline_mode<synchronous>, transform_indices = @transform_11, window_bounds = array<i64: 64, 1>}, {pipeline_mode = #tpu.pipeline_mode<synchronous>, transform_indices = @transform_12, window_bounds = array<i64: 1, 1>}, {pipeline_mode = #tpu.pipeline_mode<synchronous>, transform_indices = @transform_13, window_bounds = array<i64: 2, 1>}]} {
    %c0 = arith.constant 0 : index
    %c0_0 = arith.constant 0 : index
    %c0_1 = arith.constant 0 : index
    %0 = vector.load %arg1[%c0, %c0_0, %c0_1] : memref<8x2x32xf32, #tpu.memory_space<vmem>>, vector<8x2x32xf32>
    %1 = vector.shape_cast %0 : vector<8x2x32xf32> to vector<16x32xf32>
    %c0_2 = arith.constant 0 : index
    %c0_3 = arith.constant 0 : index
    %2 = vector.load %arg2[%c0_2, %c0_3] : memref<32x64xf32, #tpu.memory_space<vmem>>, vector<32x64xf32>
    %cst = arith.constant dense<0.000000e+00> : vector<16x64xf32>
    %3 = tpu.matmul %1, %2, %cst {dimension_numbers = #tpu.dot_dimension_numbers<[1], [0], [0], [1], [0, 0, 1, 1], [], []>} : vector<16x32xf32>, vector<32x64xf32>, vector<16x64xf32> -> vector<16x64xf32>
    %c0_4 = arith.constant 0 : index
    %c0_5 = arith.constant 0 : index
    %4 = vector.load %arg8[%c0_4, %c0_5] : memref<1x64xf32, #tpu.memory_space<vmem>>, vector<1x64xf32>
    %5 = vector.broadcast %4 : vector<1x64xf32> to vector<16x64xf32>
    %6 = arith.addf %3, %5 : vector<16x64xf32>
    %c0_6 = arith.constant 0 : index
    %c0_7 = arith.constant 0 : index
    %7 = vector.load %arg3[%c0_6, %c0_7] : memref<32x64xf32, #tpu.memory_space<vmem>>, vector<32x64xf32>
    %cst_8 = arith.constant dense<0.000000e+00> : vector<16x64xf32>
    %8 = tpu.matmul %1, %7, %cst_8 {dimension_numbers = #tpu.dot_dimension_numbers<[1], [0], [0], [1], [0, 0, 1, 1], [], []>} : vector<16x32xf32>, vector<32x64xf32>, vector<16x64xf32> -> vector<16x64xf32>
    %c0_9 = arith.constant 0 : index
    %c0_10 = arith.constant 0 : index
    %9 = vector.load %arg9[%c0_9, %c0_10] : memref<1x64xf32, #tpu.memory_space<vmem>>, vector<1x64xf32>
    %10 = vector.broadcast %9 : vector<1x64xf32> to vector<16x64xf32>
    %11 = arith.addf %8, %10 : vector<16x64xf32>
    %c0_11 = arith.constant 0 : index
    %c0_12 = arith.constant 0 : index
    %12 = vector.load %arg4[%c0_11, %c0_12] : memref<32x64xf32, #tpu.memory_space<vmem>>, vector<32x64xf32>
    %cst_13 = arith.constant dense<0.000000e+00> : vector<16x64xf32>
    %13 = tpu.matmul %1, %12, %cst_13 {dimension_numbers = #tpu.dot_dimension_numbers<[1], [0], [0], [1], [0, 0, 1, 1], [], []>} : vector<16x32xf32>, vector<32x64xf32>, vector<16x64xf32> -> vector<16x64xf32>
    %c0_14 = arith.constant 0 : index
    %c0_15 = arith.constant 0 : index
    %14 = vector.load %arg10[%c0_14, %c0_15] : memref<1x64xf32, #tpu.memory_space<vmem>>, vector<1x64xf32>
    %15 = vector.broadcast %14 : vector<1x64xf32> to vector<16x64xf32>
    %16 = arith.addf %13, %15 : vector<16x64xf32>
    %c0_16 = arith.constant 0 : index
    %c0_17 = arith.constant 0 : index
    %17 = vector.load %arg5[%c0_16, %c0_17] : memref<64x64xf32, #tpu.memory_space<vmem>>, vector<64x64xf32>
    %c0_18 = arith.constant 0 : index
    %c0_19 = arith.constant 0 : index
    %18 = vector.load %arg6[%c0_18, %c0_19] : memref<64x64xf32, #tpu.memory_space<vmem>>, vector<64x64xf32>
    %c0_20 = arith.constant 0 : index
    %c0_21 = arith.constant 0 : index
    %19 = vector.load %arg7[%c0_20, %c0_21] : memref<64x64xf32, #tpu.memory_space<vmem>>, vector<64x64xf32>
    %c0_22 = arith.constant 0 : index
    %c0_23 = arith.constant 0 : index
    %20 = vector.load %arg11[%c0_22, %c0_23] : memref<1x64xf32, #tpu.memory_space<vmem>>, vector<1x64xf32>
    %cst_24 = arith.constant 0.000000e+00 : f32
    %21 = vector.broadcast %cst_24 : f32 to vector<2x64xf32>
    %cst_25 = arith.constant dense<0.000000e+00> : vector<2x64xf32>
    %22 = tpu.matmul %21, %17, %cst_25 {dimension_numbers = #tpu.dot_dimension_numbers<[1], [0], [0], [1], [0, 0, 1, 1], [], []>} : vector<2x64xf32>, vector<64x64xf32>, vector<2x64xf32> -> vector<2x64xf32>
    %cst_26 = arith.constant dense<0.000000e+00> : vector<2x64xf32>
    %23 = tpu.matmul %21, %18, %cst_26 {dimension_numbers = #tpu.dot_dimension_numbers<[1], [0], [0], [1], [0, 0, 1, 1], [], []>} : vector<2x64xf32>, vector<64x64xf32>, vector<2x64xf32> -> vector<2x64xf32>
    %cst_27 = arith.constant dense<0.000000e+00> : vector<2x64xf32>
    %24 = tpu.matmul %21, %19, %cst_27 {dimension_numbers = #tpu.dot_dimension_numbers<[1], [0], [0], [1], [0, 0, 1, 1], [], []>} : vector<2x64xf32>, vector<64x64xf32>, vector<2x64xf32> -> vector<2x64xf32>
    %25 = vector.broadcast %20 : vector<1x64xf32> to vector<2x64xf32>
    %26 = arith.addf %24, %25 : vector<2x64xf32>
    %27 = vector.extract_strided_slice %6 {offsets = [0, 0], sizes = [2, 64], strides = [1, 1]} : vector<16x64xf32> to vector<2x64xf32>
    %28 = arith.addf %27, %22 : vector<2x64xf32>
    %29 = arith.negf %28 : vector<2x64xf32>
    %30 = math.exp %29 : vector<2x64xf32>
    %cst_28 = arith.constant 1.000000e+00 : f32
    %31 = vector.broadcast %cst_28 : f32 to vector<2x64xf32>
    %32 = arith.addf %31, %30 : vector<2x64xf32>
    %33 = arith.divf %31, %32 : vector<2x64xf32>
    %34 = vector.extract_strided_slice %11 {offsets = [0, 0], sizes = [2, 64], strides = [1, 1]} : vector<16x64xf32> to vector<2x64xf32>
    %35 = arith.addf %34, %23 : vector<2x64xf32>
    %36 = arith.negf %35 : vector<2x64xf32>
    %37 = math.exp %36 : vector<2x64xf32>
    %cst_29 = arith.constant 1.000000e+00 : f32
    %38 = vector.broadcast %cst_29 : f32 to vector<2x64xf32>
    %39 = arith.addf %38, %37 : vector<2x64xf32>
    %40 = arith.divf %38, %39 : vector<2x64xf32>
    %41 = vector.extract_strided_slice %16 {offsets = [0, 0], sizes = [2, 64], strides = [1, 1]} : vector<16x64xf32> to vector<2x64xf32>
    %42 = arith.mulf %33, %26 : vector<2x64xf32>
    %43 = arith.addf %41, %42 : vector<2x64xf32>
    %44 = math.tanh %43 : vector<2x64xf32>
    %cst_30 = arith.constant 1.000000e+00 : f32
    %45 = vector.broadcast %cst_30 : f32 to vector<2x64xf32>
    %46 = arith.subf %45, %40 : vector<2x64xf32>
    %47 = arith.mulf %46, %44 : vector<2x64xf32>
    %48 = arith.mulf %40, %21 : vector<2x64xf32>
    %49 = arith.addf %47, %48 : vector<2x64xf32>
    %cst_31 = arith.constant dense<0.000000e+00> : vector<2x64xf32>
    %50 = tpu.matmul %49, %17, %cst_31 {dimension_numbers = #tpu.dot_dimension_numbers<[1], [0], [0], [1], [0, 0, 1, 1], [], []>} : vector<2x64xf32>, vector<64x64xf32>, vector<2x64xf32> -> vector<2x64xf32>
    %cst_32 = arith.constant dense<0.000000e+00> : vector<2x64xf32>
    %51 = tpu.matmul %49, %18, %cst_32 {dimension_numbers = #tpu.dot_dimension_numbers<[1], [0], [0], [1], [0, 0, 1, 1], [], []>} : vector<2x64xf32>, vector<64x64xf32>, vector<2x64xf32> -> vector<2x64xf32>
    %cst_33 = arith.constant dense<0.000000e+00> : vector<2x64xf32>
    %52 = tpu.matmul %49, %19, %cst_33 {dimension_numbers = #tpu.dot_dimension_numbers<[1], [0], [0], [1], [0, 0, 1, 1], [], []>} : vector<2x64xf32>, vector<64x64xf32>, vector<2x64xf32> -> vector<2x64xf32>
    %53 = vector.broadcast %20 : vector<1x64xf32> to vector<2x64xf32>
    %54 = arith.addf %52, %53 : vector<2x64xf32>
    %55 = vector.extract_strided_slice %6 {offsets = [2, 0], sizes = [2, 64], strides = [1, 1]} : vector<16x64xf32> to vector<2x64xf32>
    %56 = arith.addf %55, %50 : vector<2x64xf32>
    %57 = arith.negf %56 : vector<2x64xf32>
    %58 = math.exp %57 : vector<2x64xf32>
    %cst_34 = arith.constant 1.000000e+00 : f32
    %59 = vector.broadcast %cst_34 : f32 to vector<2x64xf32>
    %60 = arith.addf %59, %58 : vector<2x64xf32>
    %61 = arith.divf %59, %60 : vector<2x64xf32>
    %62 = vector.extract_strided_slice %11 {offsets = [2, 0], sizes = [2, 64], strides = [1, 1]} : vector<16x64xf32> to vector<2x64xf32>
    %63 = arith.addf %62, %51 : vector<2x64xf32>
    %64 = arith.negf %63 : vector<2x64xf32>
    %65 = math.exp %64 : vector<2x64xf32>
    %cst_35 = arith.constant 1.000000e+00 : f32
    %66 = vector.broadcast %cst_35 : f32 to vector<2x64xf32>
    %67 = arith.addf %66, %65 : vector<2x64xf32>
    %68 = arith.divf %66, %67 : vector<2x64xf32>
    %69 = vector.extract_strided_slice %16 {offsets = [2, 0], sizes = [2, 64], strides = [1, 1]} : vector<16x64xf32> to vector<2x64xf32>
    %70 = arith.mulf %61, %54 : vector<2x64xf32>
    %71 = arith.addf %69, %70 : vector<2x64xf32>
    %72 = math.tanh %71 : vector<2x64xf32>
    %cst_36 = arith.constant 1.000000e+00 : f32
    %73 = vector.broadcast %cst_36 : f32 to vector<2x64xf32>
    %74 = arith.subf %73, %68 : vector<2x64xf32>
    %75 = arith.mulf %74, %72 : vector<2x64xf32>
    %76 = arith.mulf %68, %49 : vector<2x64xf32>
    %77 = arith.addf %75, %76 : vector<2x64xf32>
    %cst_37 = arith.constant dense<0.000000e+00> : vector<2x64xf32>
    %78 = tpu.matmul %77, %17, %cst_37 {dimension_numbers = #tpu.dot_dimension_numbers<[1], [0], [0], [1], [0, 0, 1, 1], [], []>} : vector<2x64xf32>, vector<64x64xf32>, vector<2x64xf32> -> vector<2x64xf32>
    %cst_38 = arith.constant dense<0.000000e+00> : vector<2x64xf32>
    %79 = tpu.matmul %77, %18, %cst_38 {dimension_numbers = #tpu.dot_dimension_numbers<[1], [0], [0], [1], [0, 0, 1, 1], [], []>} : vector<2x64xf32>, vector<64x64xf32>, vector<2x64xf32> -> vector<2x64xf32>
    %cst_39 = arith.constant dense<0.000000e+00> : vector<2x64xf32>
    %80 = tpu.matmul %77, %19, %cst_39 {dimension_numbers = #tpu.dot_dimension_numbers<[1], [0], [0], [1], [0, 0, 1, 1], [], []>} : vector<2x64xf32>, vector<64x64xf32>, vector<2x64xf32> -> vector<2x64xf32>
    %81 = vector.broadcast %20 : vector<1x64xf32> to vector<2x64xf32>
    %82 = arith.addf %80, %81 : vector<2x64xf32>
    %83 = vector.extract_strided_slice %6 {offsets = [4, 0], sizes = [2, 64], strides = [1, 1]} : vector<16x64xf32> to vector<2x64xf32>
    %84 = arith.addf %83, %78 : vector<2x64xf32>
    %85 = arith.negf %84 : vector<2x64xf32>
    %86 = math.exp %85 : vector<2x64xf32>
    %cst_40 = arith.constant 1.000000e+00 : f32
    %87 = vector.broadcast %cst_40 : f32 to vector<2x64xf32>
    %88 = arith.addf %87, %86 : vector<2x64xf32>
    %89 = arith.divf %87, %88 : vector<2x64xf32>
    %90 = vector.extract_strided_slice %11 {offsets = [4, 0], sizes = [2, 64], strides = [1, 1]} : vector<16x64xf32> to vector<2x64xf32>
    %91 = arith.addf %90, %79 : vector<2x64xf32>
    %92 = arith.negf %91 : vector<2x64xf32>
    %93 = math.exp %92 : vector<2x64xf32>
    %cst_41 = arith.constant 1.000000e+00 : f32
    %94 = vector.broadcast %cst_41 : f32 to vector<2x64xf32>
    %95 = arith.addf %94, %93 : vector<2x64xf32>
    %96 = arith.divf %94, %95 : vector<2x64xf32>
    %97 = vector.extract_strided_slice %16 {offsets = [4, 0], sizes = [2, 64], strides = [1, 1]} : vector<16x64xf32> to vector<2x64xf32>
    %98 = arith.mulf %89, %82 : vector<2x64xf32>
    %99 = arith.addf %97, %98 : vector<2x64xf32>
    %100 = math.tanh %99 : vector<2x64xf32>
    %cst_42 = arith.constant 1.000000e+00 : f32
    %101 = vector.broadcast %cst_42 : f32 to vector<2x64xf32>
    %102 = arith.subf %101, %96 : vector<2x64xf32>
    %103 = arith.mulf %102, %100 : vector<2x64xf32>
    %104 = arith.mulf %96, %77 : vector<2x64xf32>
    %105 = arith.addf %103, %104 : vector<2x64xf32>
    %cst_43 = arith.constant dense<0.000000e+00> : vector<2x64xf32>
    %106 = tpu.matmul %105, %17, %cst_43 {dimension_numbers = #tpu.dot_dimension_numbers<[1], [0], [0], [1], [0, 0, 1, 1], [], []>} : vector<2x64xf32>, vector<64x64xf32>, vector<2x64xf32> -> vector<2x64xf32>
    %cst_44 = arith.constant dense<0.000000e+00> : vector<2x64xf32>
    %107 = tpu.matmul %105, %18, %cst_44 {dimension_numbers = #tpu.dot_dimension_numbers<[1], [0], [0], [1], [0, 0, 1, 1], [], []>} : vector<2x64xf32>, vector<64x64xf32>, vector<2x64xf32> -> vector<2x64xf32>
    %cst_45 = arith.constant dense<0.000000e+00> : vector<2x64xf32>
    %108 = tpu.matmul %105, %19, %cst_45 {dimension_numbers = #tpu.dot_dimension_numbers<[1], [0], [0], [1], [0, 0, 1, 1], [], []>} : vector<2x64xf32>, vector<64x64xf32>, vector<2x64xf32> -> vector<2x64xf32>
    %109 = vector.broadcast %20 : vector<1x64xf32> to vector<2x64xf32>
    %110 = arith.addf %108, %109 : vector<2x64xf32>
    %111 = vector.extract_strided_slice %6 {offsets = [6, 0], sizes = [2, 64], strides = [1, 1]} : vector<16x64xf32> to vector<2x64xf32>
    %112 = arith.addf %111, %106 : vector<2x64xf32>
    %113 = arith.negf %112 : vector<2x64xf32>
    %114 = math.exp %113 : vector<2x64xf32>
    %cst_46 = arith.constant 1.000000e+00 : f32
    %115 = vector.broadcast %cst_46 : f32 to vector<2x64xf32>
    %116 = arith.addf %115, %114 : vector<2x64xf32>
    %117 = arith.divf %115, %116 : vector<2x64xf32>
    %118 = vector.extract_strided_slice %11 {offsets = [6, 0], sizes = [2, 64], strides = [1, 1]} : vector<16x64xf32> to vector<2x64xf32>
    %119 = arith.addf %118, %107 : vector<2x64xf32>
    %120 = arith.negf %119 : vector<2x64xf32>
    %121 = math.exp %120 : vector<2x64xf32>
    %cst_47 = arith.constant 1.000000e+00 : f32
    %122 = vector.broadcast %cst_47 : f32 to vector<2x64xf32>
    %123 = arith.addf %122, %121 : vector<2x64xf32>
    %124 = arith.divf %122, %123 : vector<2x64xf32>
    %125 = vector.extract_strided_slice %16 {offsets = [6, 0], sizes = [2, 64], strides = [1, 1]} : vector<16x64xf32> to vector<2x64xf32>
    %126 = arith.mulf %117, %110 : vector<2x64xf32>
    %127 = arith.addf %125, %126 : vector<2x64xf32>
    %128 = math.tanh %127 : vector<2x64xf32>
    %cst_48 = arith.constant 1.000000e+00 : f32
    %129 = vector.broadcast %cst_48 : f32 to vector<2x64xf32>
    %130 = arith.subf %129, %124 : vector<2x64xf32>
    %131 = arith.mulf %130, %128 : vector<2x64xf32>
    %132 = arith.mulf %124, %105 : vector<2x64xf32>
    %133 = arith.addf %131, %132 : vector<2x64xf32>
    %cst_49 = arith.constant dense<0.000000e+00> : vector<2x64xf32>
    %134 = tpu.matmul %133, %17, %cst_49 {dimension_numbers = #tpu.dot_dimension_numbers<[1], [0], [0], [1], [0, 0, 1, 1], [], []>} : vector<2x64xf32>, vector<64x64xf32>, vector<2x64xf32> -> vector<2x64xf32>
    %cst_50 = arith.constant dense<0.000000e+00> : vector<2x64xf32>
    %135 = tpu.matmul %133, %18, %cst_50 {dimension_numbers = #tpu.dot_dimension_numbers<[1], [0], [0], [1], [0, 0, 1, 1], [], []>} : vector<2x64xf32>, vector<64x64xf32>, vector<2x64xf32> -> vector<2x64xf32>
    %cst_51 = arith.constant dense<0.000000e+00> : vector<2x64xf32>
    %136 = tpu.matmul %133, %19, %cst_51 {dimension_numbers = #tpu.dot_dimension_numbers<[1], [0], [0], [1], [0, 0, 1, 1], [], []>} : vector<2x64xf32>, vector<64x64xf32>, vector<2x64xf32> -> vector<2x64xf32>
    %137 = vector.broadcast %20 : vector<1x64xf32> to vector<2x64xf32>
    %138 = arith.addf %136, %137 : vector<2x64xf32>
    %139 = vector.extract_strided_slice %6 {offsets = [8, 0], sizes = [2, 64], strides = [1, 1]} : vector<16x64xf32> to vector<2x64xf32>
    %140 = arith.addf %139, %134 : vector<2x64xf32>
    %141 = arith.negf %140 : vector<2x64xf32>
    %142 = math.exp %141 : vector<2x64xf32>
    %cst_52 = arith.constant 1.000000e+00 : f32
    %143 = vector.broadcast %cst_52 : f32 to vector<2x64xf32>
    %144 = arith.addf %143, %142 : vector<2x64xf32>
    %145 = arith.divf %143, %144 : vector<2x64xf32>
    %146 = vector.extract_strided_slice %11 {offsets = [8, 0], sizes = [2, 64], strides = [1, 1]} : vector<16x64xf32> to vector<2x64xf32>
    %147 = arith.addf %146, %135 : vector<2x64xf32>
    %148 = arith.negf %147 : vector<2x64xf32>
    %149 = math.exp %148 : vector<2x64xf32>
    %cst_53 = arith.constant 1.000000e+00 : f32
    %150 = vector.broadcast %cst_53 : f32 to vector<2x64xf32>
    %151 = arith.addf %150, %149 : vector<2x64xf32>
    %152 = arith.divf %150, %151 : vector<2x64xf32>
    %153 = vector.extract_strided_slice %16 {offsets = [8, 0], sizes = [2, 64], strides = [1, 1]} : vector<16x64xf32> to vector<2x64xf32>
    %154 = arith.mulf %145, %138 : vector<2x64xf32>
    %155 = arith.addf %153, %154 : vector<2x64xf32>
    %156 = math.tanh %155 : vector<2x64xf32>
    %cst_54 = arith.constant 1.000000e+00 : f32
    %157 = vector.broadcast %cst_54 : f32 to vector<2x64xf32>
    %158 = arith.subf %157, %152 : vector<2x64xf32>
    %159 = arith.mulf %158, %156 : vector<2x64xf32>
    %160 = arith.mulf %152, %133 : vector<2x64xf32>
    %161 = arith.addf %159, %160 : vector<2x64xf32>
    %cst_55 = arith.constant dense<0.000000e+00> : vector<2x64xf32>
    %162 = tpu.matmul %161, %17, %cst_55 {dimension_numbers = #tpu.dot_dimension_numbers<[1], [0], [0], [1], [0, 0, 1, 1], [], []>} : vector<2x64xf32>, vector<64x64xf32>, vector<2x64xf32> -> vector<2x64xf32>
    %cst_56 = arith.constant dense<0.000000e+00> : vector<2x64xf32>
    %163 = tpu.matmul %161, %18, %cst_56 {dimension_numbers = #tpu.dot_dimension_numbers<[1], [0], [0], [1], [0, 0, 1, 1], [], []>} : vector<2x64xf32>, vector<64x64xf32>, vector<2x64xf32> -> vector<2x64xf32>
    %cst_57 = arith.constant dense<0.000000e+00> : vector<2x64xf32>
    %164 = tpu.matmul %161, %19, %cst_57 {dimension_numbers = #tpu.dot_dimension_numbers<[1], [0], [0], [1], [0, 0, 1, 1], [], []>} : vector<2x64xf32>, vector<64x64xf32>, vector<2x64xf32> -> vector<2x64xf32>
    %165 = vector.broadcast %20 : vector<1x64xf32> to vector<2x64xf32>
    %166 = arith.addf %164, %165 : vector<2x64xf32>
    %167 = vector.extract_strided_slice %6 {offsets = [10, 0], sizes = [2, 64], strides = [1, 1]} : vector<16x64xf32> to vector<2x64xf32>
    %168 = arith.addf %167, %162 : vector<2x64xf32>
    %169 = arith.negf %168 : vector<2x64xf32>
    %170 = math.exp %169 : vector<2x64xf32>
    %cst_58 = arith.constant 1.000000e+00 : f32
    %171 = vector.broadcast %cst_58 : f32 to vector<2x64xf32>
    %172 = arith.addf %171, %170 : vector<2x64xf32>
    %173 = arith.divf %171, %172 : vector<2x64xf32>
    %174 = vector.extract_strided_slice %11 {offsets = [10, 0], sizes = [2, 64], strides = [1, 1]} : vector<16x64xf32> to vector<2x64xf32>
    %175 = arith.addf %174, %163 : vector<2x64xf32>
    %176 = arith.negf %175 : vector<2x64xf32>
    %177 = math.exp %176 : vector<2x64xf32>
    %cst_59 = arith.constant 1.000000e+00 : f32
    %178 = vector.broadcast %cst_59 : f32 to vector<2x64xf32>
    %179 = arith.addf %178, %177 : vector<2x64xf32>
    %180 = arith.divf %178, %179 : vector<2x64xf32>
    %181 = vector.extract_strided_slice %16 {offsets = [10, 0], sizes = [2, 64], strides = [1, 1]} : vector<16x64xf32> to vector<2x64xf32>
    %182 = arith.mulf %173, %166 : vector<2x64xf32>
    %183 = arith.addf %181, %182 : vector<2x64xf32>
    %184 = math.tanh %183 : vector<2x64xf32>
    %cst_60 = arith.constant 1.000000e+00 : f32
    %185 = vector.broadcast %cst_60 : f32 to vector<2x64xf32>
    %186 = arith.subf %185, %180 : vector<2x64xf32>
    %187 = arith.mulf %186, %184 : vector<2x64xf32>
    %188 = arith.mulf %180, %161 : vector<2x64xf32>
    %189 = arith.addf %187, %188 : vector<2x64xf32>
    %cst_61 = arith.constant dense<0.000000e+00> : vector<2x64xf32>
    %190 = tpu.matmul %189, %17, %cst_61 {dimension_numbers = #tpu.dot_dimension_numbers<[1], [0], [0], [1], [0, 0, 1, 1], [], []>} : vector<2x64xf32>, vector<64x64xf32>, vector<2x64xf32> -> vector<2x64xf32>
    %cst_62 = arith.constant dense<0.000000e+00> : vector<2x64xf32>
    %191 = tpu.matmul %189, %18, %cst_62 {dimension_numbers = #tpu.dot_dimension_numbers<[1], [0], [0], [1], [0, 0, 1, 1], [], []>} : vector<2x64xf32>, vector<64x64xf32>, vector<2x64xf32> -> vector<2x64xf32>
    %cst_63 = arith.constant dense<0.000000e+00> : vector<2x64xf32>
    %192 = tpu.matmul %189, %19, %cst_63 {dimension_numbers = #tpu.dot_dimension_numbers<[1], [0], [0], [1], [0, 0, 1, 1], [], []>} : vector<2x64xf32>, vector<64x64xf32>, vector<2x64xf32> -> vector<2x64xf32>
    %193 = vector.broadcast %20 : vector<1x64xf32> to vector<2x64xf32>
    %194 = arith.addf %192, %193 : vector<2x64xf32>
    %195 = vector.extract_strided_slice %6 {offsets = [12, 0], sizes = [2, 64], strides = [1, 1]} : vector<16x64xf32> to vector<2x64xf32>
    %196 = arith.addf %195, %190 : vector<2x64xf32>
    %197 = arith.negf %196 : vector<2x64xf32>
    %198 = math.exp %197 : vector<2x64xf32>
    %cst_64 = arith.constant 1.000000e+00 : f32
    %199 = vector.broadcast %cst_64 : f32 to vector<2x64xf32>
    %200 = arith.addf %199, %198 : vector<2x64xf32>
    %201 = arith.divf %199, %200 : vector<2x64xf32>
    %202 = vector.extract_strided_slice %11 {offsets = [12, 0], sizes = [2, 64], strides = [1, 1]} : vector<16x64xf32> to vector<2x64xf32>
    %203 = arith.addf %202, %191 : vector<2x64xf32>
    %204 = arith.negf %203 : vector<2x64xf32>
    %205 = math.exp %204 : vector<2x64xf32>
    %cst_65 = arith.constant 1.000000e+00 : f32
    %206 = vector.broadcast %cst_65 : f32 to vector<2x64xf32>
    %207 = arith.addf %206, %205 : vector<2x64xf32>
    %208 = arith.divf %206, %207 : vector<2x64xf32>
    %209 = vector.extract_strided_slice %16 {offsets = [12, 0], sizes = [2, 64], strides = [1, 1]} : vector<16x64xf32> to vector<2x64xf32>
    %210 = arith.mulf %201, %194 : vector<2x64xf32>
    %211 = arith.addf %209, %210 : vector<2x64xf32>
    %212 = math.tanh %211 : vector<2x64xf32>
    %cst_66 = arith.constant 1.000000e+00 : f32
    %213 = vector.broadcast %cst_66 : f32 to vector<2x64xf32>
    %214 = arith.subf %213, %208 : vector<2x64xf32>
    %215 = arith.mulf %214, %212 : vector<2x64xf32>
    %216 = arith.mulf %208, %189 : vector<2x64xf32>
    %217 = arith.addf %215, %216 : vector<2x64xf32>
    %cst_67 = arith.constant dense<0.000000e+00> : vector<2x64xf32>
    %218 = tpu.matmul %217, %17, %cst_67 {dimension_numbers = #tpu.dot_dimension_numbers<[1], [0], [0], [1], [0, 0, 1, 1], [], []>} : vector<2x64xf32>, vector<64x64xf32>, vector<2x64xf32> -> vector<2x64xf32>
    %cst_68 = arith.constant dense<0.000000e+00> : vector<2x64xf32>
    %219 = tpu.matmul %217, %18, %cst_68 {dimension_numbers = #tpu.dot_dimension_numbers<[1], [0], [0], [1], [0, 0, 1, 1], [], []>} : vector<2x64xf32>, vector<64x64xf32>, vector<2x64xf32> -> vector<2x64xf32>
    %cst_69 = arith.constant dense<0.000000e+00> : vector<2x64xf32>
    %220 = tpu.matmul %217, %19, %cst_69 {dimension_numbers = #tpu.dot_dimension_numbers<[1], [0], [0], [1], [0, 0, 1, 1], [], []>} : vector<2x64xf32>, vector<64x64xf32>, vector<2x64xf32> -> vector<2x64xf32>
    %221 = vector.broadcast %20 : vector<1x64xf32> to vector<2x64xf32>
    %222 = arith.addf %220, %221 : vector<2x64xf32>
    %223 = vector.extract_strided_slice %6 {offsets = [14, 0], sizes = [2, 64], strides = [1, 1]} : vector<16x64xf32> to vector<2x64xf32>
    %224 = arith.addf %223, %218 : vector<2x64xf32>
    %225 = arith.negf %224 : vector<2x64xf32>
    %226 = math.exp %225 : vector<2x64xf32>
    %cst_70 = arith.constant 1.000000e+00 : f32
    %227 = vector.broadcast %cst_70 : f32 to vector<2x64xf32>
    %228 = arith.addf %227, %226 : vector<2x64xf32>
    %229 = arith.divf %227, %228 : vector<2x64xf32>
    %230 = vector.extract_strided_slice %11 {offsets = [14, 0], sizes = [2, 64], strides = [1, 1]} : vector<16x64xf32> to vector<2x64xf32>
    %231 = arith.addf %230, %219 : vector<2x64xf32>
    %232 = arith.negf %231 : vector<2x64xf32>
    %233 = math.exp %232 : vector<2x64xf32>
    %cst_71 = arith.constant 1.000000e+00 : f32
    %234 = vector.broadcast %cst_71 : f32 to vector<2x64xf32>
    %235 = arith.addf %234, %233 : vector<2x64xf32>
    %236 = arith.divf %234, %235 : vector<2x64xf32>
    %237 = vector.extract_strided_slice %16 {offsets = [14, 0], sizes = [2, 64], strides = [1, 1]} : vector<16x64xf32> to vector<2x64xf32>
    %238 = arith.mulf %229, %222 : vector<2x64xf32>
    %239 = arith.addf %237, %238 : vector<2x64xf32>
    %240 = math.tanh %239 : vector<2x64xf32>
    %cst_72 = arith.constant 1.000000e+00 : f32
    %241 = vector.broadcast %cst_72 : f32 to vector<2x64xf32>
    %242 = arith.subf %241, %236 : vector<2x64xf32>
    %243 = arith.mulf %242, %240 : vector<2x64xf32>
    %244 = arith.mulf %236, %217 : vector<2x64xf32>
    %245 = arith.addf %243, %244 : vector<2x64xf32>
    %c0_73 = arith.constant 0 : index
    %c0_74 = arith.constant 0 : index
    %246 = vector.load %arg12[%c0_73, %c0_74] : memref<64x1xf32, #tpu.memory_space<vmem>>, vector<64x1xf32>
    %cst_75 = arith.constant dense<0.000000e+00> : vector<2x1xf32>
    %247 = tpu.matmul %245, %246, %cst_75 {dimension_numbers = #tpu.dot_dimension_numbers<[1], [0], [0], [1], [0, 0, 1, 1], [], []>} : vector<2x64xf32>, vector<64x1xf32>, vector<2x1xf32> -> vector<2x1xf32>
    %c0_76 = arith.constant 0 : index
    %c0_77 = arith.constant 0 : index
    %248 = vector.load %arg13[%c0_76, %c0_77] : memref<1x1xf32, #tpu.memory_space<vmem>>, vector<1x1xf32>
    %249 = vector.broadcast %248 : vector<1x1xf32> to vector<2x1xf32>
    %250 = arith.addf %247, %249 : vector<2x1xf32>
    %cst_78 = arith.constant dense<0xFF800000> : vector<1xf32>
    %251 = vector.multi_reduction <maximumf>, %250, %cst_78 [0] : vector<2x1xf32> to vector<1xf32>
    %252 = vector.shape_cast %251 : vector<1xf32> to vector<1x1xf32>
    %253 = vector.broadcast %252 : vector<1x1xf32> to vector<2x1xf32>
    %254 = arith.subf %250, %253 : vector<2x1xf32>
    %255 = math.exp %254 : vector<2x1xf32>
    %cst_79 = arith.constant dense<0.000000e+00> : vector<1xf32>
    %256 = vector.multi_reduction <add>, %255, %cst_79 [0] : vector<2x1xf32> to vector<1xf32>
    %257 = vector.shape_cast %256 : vector<1xf32> to vector<1x1xf32>
    %258 = vector.broadcast %257 : vector<1x1xf32> to vector<2x1xf32>
    %259 = arith.divf %255, %258 : vector<2x1xf32>
    %c0_80 = arith.constant 0 : index
    %c0_81 = arith.constant 0 : index
    %260 = vector.load %arg14[%c0_80, %c0_81] : memref<2x1xf32, #tpu.memory_space<vmem>>, vector<2x1xf32>
    tpu.vector_store %arg14[%c0_80, %c0_81], %259 {strides = array<i32>} : memref<2x1xf32, #tpu.memory_space<vmem>>, vector<2x1xf32>,
    return
  }
  func.func @transform_0(%arg0: i32) -> (i32, i32, i32) {
    %c0_i32 = arith.constant 0 : i32
    %c0_i32_0 = arith.constant 0 : i32
    %c0_i32_1 = arith.constant 0 : i32
    %c0_i32_2 = arith.constant 0 : i32
    return %c0_i32, %c0_i32_0, %c0_i32_1 : i32, i32, i32
  }
  func.func @transform_1(%arg0: i32) -> (i32, i32) {
    %c0_i32 = arith.constant 0 : i32
    %c0_i32_0 = arith.constant 0 : i32
    %c0_i32_1 = arith.constant 0 : i32
    return %c0_i32, %c0_i32_0 : i32, i32
  }
  func.func @transform_2(%arg0: i32) -> (i32, i32) {
    %c0_i32 = arith.constant 0 : i32
    %c0_i32_0 = arith.constant 0 : i32
    %c0_i32_1 = arith.constant 0 : i32
    return %c0_i32, %c0_i32_0 : i32, i32
  }
  func.func @transform_3(%arg0: i32) -> (i32, i32) {
    %c0_i32 = arith.constant 0 : i32
    %c0_i32_0 = arith.constant 0 : i32
    %c0_i32_1 = arith.constant 0 : i32
    return %c0_i32, %c0_i32_0 : i32, i32
  }
  func.func @transform_4(%arg0: i32) -> (i32, i32) {
    %c0_i32 = arith.constant 0 : i32
    %c0_i32_0 = arith.constant 0 : i32
    %c0_i32_1 = arith.constant 0 : i32
    return %c0_i32, %c0_i32_0 : i32, i32
  }
  func.func @transform_5(%arg0: i32) -> (i32, i32) {
    %c0_i32 = arith.constant 0 : i32
    %c0_i32_0 = arith.constant 0 : i32
    %c0_i32_1 = arith.constant 0 : i32
    return %c0_i32, %c0_i32_0 : i32, i32
  }
  func.func @transform_6(%arg0: i32) -> (i32, i32) {
    %c0_i32 = arith.constant 0 : i32
    %c0_i32_0 = arith.constant 0 : i32
    %c0_i32_1 = arith.constant 0 : i32
    return %c0_i32, %c0_i32_0 : i32, i32
  }
  func.func @transform_7(%arg0: i32) -> (i32, i32) {
    %c0_i32 = arith.constant 0 : i32
    %c0_i32_0 = arith.constant 0 : i32
    %c0_i32_1 = arith.constant 0 : i32
    return %c0_i32, %c0_i32_0 : i32, i32
  }
  func.func @transform_8(%arg0: i32) -> (i32, i32) {
    %c0_i32 = arith.constant 0 : i32
    %c0_i32_0 = arith.constant 0 : i32
    %c0_i32_1 = arith.constant 0 : i32
    return %c0_i32, %c0_i32_0 : i32, i32
  }
  func.func @transform_9(%arg0: i32) -> (i32, i32) {
    %c0_i32 = arith.constant 0 : i32
    %c0_i32_0 = arith.constant 0 : i32
    %c0_i32_1 = arith.constant 0 : i32
    return %c0_i32, %c0_i32_0 : i32, i32
  }
  func.func @transform_10(%arg0: i32) -> (i32, i32) {
    %c0_i32 = arith.constant 0 : i32
    %c0_i32_0 = arith.constant 0 : i32
    %c0_i32_1 = arith.constant 0 : i32
    return %c0_i32, %c0_i32_0 : i32, i32
  }
  func.func @transform_11(%arg0: i32) -> (i32, i32) {
    %c0_i32 = arith.constant 0 : i32
    %c0_i32_0 = arith.constant 0 : i32
    %c0_i32_1 = arith.constant 0 : i32
    return %c0_i32, %c0_i32_0 : i32, i32
  }
  func.func @transform_12(%arg0: i32) -> (i32, i32) {
    %c0_i32 = arith.constant 0 : i32
    %c0_i32_0 = arith.constant 0 : i32
    %c0_i32_1 = arith.constant 0 : i32
    return %c0_i32, %c0_i32_0 : i32, i32
  }
  func.func @transform_13(%arg0: i32) -> (i32, i32) {
    %c0_i32 = arith.constant 0 : i32
    %c0_i32_0 = arith.constant 0 : i32
    %c0_i32_1 = arith.constant 0 : i32
    return %c0_i32, %c0_i32_0 : i32, i32
  }
}

</mosaic_0001>

<llo_original>
// kernel: recurrent_network_forward.1
$region0: #{recurrent_network_forward.1}
  #allocation0 [shape = 'u32[]', space=smem, size = 0x4, offset = 0x4, fixed_abs, tag = 'smem constant byte address 0x4 - core index']
  #allocation1 [shape = 'u32[144,128]{1,0:T(1,128)}', space=vmem, size = 0x12000, scoped, tag = 'internal scratch']
  #allocation2 [shape = 'f32[1,1]{1,0:T(1,128)S(1)}', space=vmem, size = 0x200, scoped, tag = 'scoped memory for recurrent_network_forward.1']
  %s0 = inlined_call_operand.vmem [shape: f32[8,2,32], index: 0, kind: input, shape index: {}]
  %s1 = inlined_call_operand.vmem [shape: f32[32,64], index: 1, kind: input, shape index: {}]
  %s2 = inlined_call_operand.vmem [shape: f32[32,64], index: 2, kind: input, shape index: {}]
  %s3 = inlined_call_operand.vmem [shape: f32[32,64], index: 3, kind: input, shape index: {}]
  %s4 = inlined_call_operand.vmem [shape: f32[64,64], index: 4, kind: input, shape index: {}]
  %s5 = inlined_call_operand.vmem [shape: f32[64,64], index: 5, kind: input, shape index: {}]
  %s6 = inlined_call_operand.vmem [shape: f32[64,64], index: 6, kind: input, shape index: {}]
  %s7 = inlined_call_operand.vmem [shape: f32[1,64], index: 7, kind: input, shape index: {}]
  %s8 = inlined_call_operand.vmem [shape: f32[1,64], index: 8, kind: input, shape index: {}]
  %s9 = inlined_call_operand.vmem [shape: f32[1,64], index: 9, kind: input, shape index: {}]
  %s10 = inlined_call_operand.vmem [shape: f32[1,64], index: 10, kind: input, shape index: {}]
  %s11 = inlined_call_operand.vmem [shape: f32[64,1], index: 11, kind: input, shape index: {}]
  %s12 = inlined_call_operand.<no memory space> [shape: f32[1,1], index: 12, kind: input, shape index: {}]
  %s13 = inlined_call_operand.vmem [shape: f32[2,1], index: 13, kind: output, shape index: {}]
  %s14 = sld [smem:[#allocation0]]
  $region62: #{recurrent_network_forward.1} parent=0
    _
  %s16 = ssub.s32 1, %s14
  %s17 = scalar_select 0, %s16, %s14
  %v18 = vstv %s12
  %19 = vst [vmem:[#allocation2] sm:$0x1] %v18
  // Predicated region
  $region2: #{recurrent_network_forward.1} parent=0 // pred_check
    _
  $region3: #{recurrent_network_forward.1} parent=0 // pred_check_branch
    %21 = sbr.rel (0) target = $region5
  $region4: #{recurrent_network_forward.1} parent=0 // pred_region
    _
  $region5: #{recurrent_network_forward.1} parent=0 // pred_fallthru
    _
  // Predicated region
  $region6: #{recurrent_network_forward.1} parent=0 // pred_check
    _
  $region7: #{recurrent_network_forward.1} parent=0 // pred_check_branch
    %23 = sbr.rel (0) target = $region9
  $region8: #{recurrent_network_forward.1} parent=0 // pred_region
    _
  $region9: #{recurrent_network_forward.1} parent=0 // pred_fallthru
    _
  // Predicated region
  $region10: #{recurrent_network_forward.1} parent=0 // pred_check
    _
  $region11: #{recurrent_network_forward.1} parent=0 // pred_check_branch
    %25 = sbr.rel (0) target = $region13
  $region12: #{recurrent_network_forward.1} parent=0 // pred_region
    _
  $region13: #{recurrent_network_forward.1} parent=0 // pred_fallthru
    _
  // Predicated region
  $region14: #{recurrent_network_forward.1} parent=0 // pred_check
    _
  $region15: #{recurrent_network_forward.1} parent=0 // pred_check_branch
    %27 = sbr.rel (0) target = $region17
  $region16: #{recurrent_network_forward.1} parent=0 // pred_region
    _
  $region17: #{recurrent_network_forward.1} parent=0 // pred_fallthru
    _
  // Predicated region
  $region18: #{recurrent_network_forward.1} parent=0 // pred_check
    _
  $region19: #{recurrent_network_forward.1} parent=0 // pred_check_branch
    %29 = sbr.rel (0) target = $region21
  $region20: #{recurrent_network_forward.1} parent=0 // pred_region
    _
  $region21: #{recurrent_network_forward.1} parent=0 // pred_fallthru
    _
  // Predicated region
  $region22: #{recurrent_network_forward.1} parent=0 // pred_check
    _
  $region23: #{recurrent_network_forward.1} parent=0 // pred_check_branch
    %31 = sbr.rel (0) target = $region25
  $region24: #{recurrent_network_forward.1} parent=0 // pred_region
    _
  $region25: #{recurrent_network_forward.1} parent=0 // pred_fallthru
    _
  // Predicated region
  $region26: #{recurrent_network_forward.1} parent=0 // pred_check
    _
  $region27: #{recurrent_network_forward.1} parent=0 // pred_check_branch
    %33 = sbr.rel (0) target = $region29
  $region28: #{recurrent_network_forward.1} parent=0 // pred_region
    _
  $region29: #{recurrent_network_forward.1} parent=0 // pred_fallthru
    _
  // Predicated region
  $region30: #{recurrent_network_forward.1} parent=0 // pred_check
    _
  $region31: #{recurrent_network_forward.1} parent=0 // pred_check_branch
    %35 = sbr.rel (0) target = $region33
  $region32: #{recurrent_network_forward.1} parent=0 // pred_region
    _
  $region33: #{recurrent_network_forward.1} parent=0 // pred_fallthru
    _
  // Predicated region
  $region34: #{recurrent_network_forward.1} parent=0 // pred_check
    _
  $region35: #{recurrent_network_forward.1} parent=0 // pred_check_branch
    %37 = sbr.rel (0) target = $region37
  $region36: #{recurrent_network_forward.1} parent=0 // pred_region
    _
  $region37: #{recurrent_network_forward.1} parent=0 // pred_fallthru
    _
  // Predicated region
  $region38: #{recurrent_network_forward.1} parent=0 // pred_check
    _
  $region39: #{recurrent_network_forward.1} parent=0 // pred_check_branch
    %39 = sbr.rel (0) target = $region41
  $region40: #{recurrent_network_forward.1} parent=0 // pred_region
    _
  $region41: #{recurrent_network_forward.1} parent=0 // pred_fallthru
    _
  // Predicated region
  $region42: #{recurrent_network_forward.1} parent=0 // pred_check
    _
  $region43: #{recurrent_network_forward.1} parent=0 // pred_check_branch
    %41 = sbr.rel (0) target = $region45
  $region44: #{recurrent_network_forward.1} parent=0 // pred_region
    _
  $region45: #{recurrent_network_forward.1} parent=0 // pred_fallthru
    _
  // Predicated region
  $region46: #{recurrent_network_forward.1} parent=0 // pred_check
    _
  $region47: #{recurrent_network_forward.1} parent=0 // pred_check_branch
    %43 = sbr.rel (0) target = $region49
  $region48: #{recurrent_network_forward.1} parent=0 // pred_region
    _
  $region49: #{recurrent_network_forward.1} parent=0 // pred_fallthru
    _
  // Predicated region
  $region50: #{recurrent_network_forward.1} parent=0 // pred_check
    _
  $region51: #{recurrent_network_forward.1} parent=0 // pred_check_branch
    %45 = sbr.rel (0) target = $region53
  $region52: #{recurrent_network_forward.1} parent=0 // pred_region
    _
  $region53: #{recurrent_network_forward.1} parent=0 // pred_fallthru
    _
  %v46 = vld [vmem:[%s0] sm:$0x3]
  %v47 = vld [vmem:[%s0 + $0x2] sm:$0x3]
  %v48 = vld [vmem:[%s0 + $0x4] sm:$0x3]
  %v49 = vld [vmem:[%s0 + $0x6] sm:$0x3]
  %v50 = vld [vmem:[%s0 + $0x8] sm:$0x3]
  %v51 = vld [vmem:[%s0 + $0xa] sm:$0x3]
  %v52 = vld [vmem:[%s0 + $0xc] sm:$0x3]
  %v53 = vld [vmem:[%s0 + $0xe] sm:$0x3]
  %v54 = vld [vmem:[%s1] sm:$0xff]
  %v55 = vld [vmem:[%s1 + $0x8] sm:$0xff]
  %v56 = vld [vmem:[%s1 + $0x10] sm:$0xff]
  %v57 = vld [vmem:[%s1 + $0x18] sm:$0xff]
  %v58 = vld [vmem:[%s7] sm:$0x1]
  %v60 = vlaneseq
  %v61 = vshrl.u32 %v60, 7
  %v62 = vsub.s32 0, %v61
  %v63 = vrot.slane %v58, %v62
  %v73 = vcombine.low %v46, %v47
  %v74 = vcombine.low %v48, %v49
  %v76 = vunpack.c.l.s4 1983009808
  %v77 = vunpack.c.0.s8 %v76
  %v78 = vlaneseq
  %v79 = vshrl.u32 %v78, 7
  %v80 = vsub.s32 %v77, %v79
  %v81 = vrot.slane %v73, %v80
  %v83 = vunpack.c.l.s4 1983009808
  %v84 = vunpack.c.0.s8 %v83
  %v85 = vlaneseq
  %v86 = vshrl.u32 %v85, 7
  %v87 = vsub.s32 %v84, %v86
  %v88 = vrot.slane %v74, %v87
  %v89 = vcombine.low %v81, %v88
  %v90 = vcombine.low %v50, %v51
  %v91 = vcombine.low %v52, %v53
  %v93 = vunpack.c.l.s4 1983009808
  %v94 = vunpack.c.0.s8 %v93
  %v95 = vlaneseq
  %v96 = vshrl.u32 %v95, 7
  %v97 = vsub.s32 %v94, %v96
  %v98 = vrot.slane %v90, %v97
  %v100 = vunpack.c.l.s4 1983009808
  %v101 = vunpack.c.0.s8 %v100
  %v102 = vlaneseq
  %v103 = vshrl.u32 %v102, 7
  %v104 = vsub.s32 %v101, %v103
  %v105 = vrot.slane %v91, %v104
  %v106 = vcombine.low %v98, %v105
  %vm107 = vcmask 261120
  %v108 = vsel %vm107, %v89, 0
  %v110 = vsel %vm107, %v106, 0
  %112 = vmatprep.subr.mxu0 0.0
  %113 = vmatpush1.msra.mxu0 0.0
  %114 = vmatprep.subr.mxu0 0.0
  %115 = vmatpush1.msra.mxu0 0.0
  %116 = vmatprep.subr.mxu0 0.0
  %117 = vmatpush1.msra.mxu0 0.0
  %118 = vmatprep.subr.mxu0 0.0
  %119 = vmatpush1.msra.mxu0 0.0
  %120 = vmatprep.subr.mxu0 0.0
  %121 = vmatpush1.msra.mxu0 0.0
  %122 = vmatprep.subr.mxu0 0.0
  %123 = vmatpush1.msra.mxu0 0.0
  %124 = vmatprep.subr.mxu0 0.0
  %125 = vmatpush1.msra.mxu0 0.0
  %126 = vmatprep.subr.mxu0 0.0
  %127 = vmatpush1.msra.mxu0 0.0
  %128 = vmatprep.subr.mxu0 0.0
  %129 = vmatpush1.msra.mxu0 0.0
  %130 = vmatprep.subr.mxu0 0.0
  %131 = vmatpush1.msra.mxu0 0.0
  %132 = vmatprep.subr.mxu0 0.0
  %133 = vmatpush1.msra.mxu0 0.0
  %134 = vmatprep.subr.mxu0 0.0
  %135 = vmatpush1.msra.mxu0 0.0
  %136 = vmatprep.subr.mxu0 0.0
  %137 = vmatpush1.msra.mxu0 %v57
  %138 = vmatprep.subr.mxu0 0.0
  %139 = vmatpush1.msra.mxu0 %v56
  %140 = vmatprep.subr.mxu0 0.0
  %141 = vmatpush1.msra.mxu0 %v55
  %142 = vmatprep.subr.mxu0 0.0
  %143 = vmatpush1.msra.mxu0 %v54
  %144 = vmatprep.subr.mxu0 0.0
  %145 = vmatpush2.msra.mxu0 0.0
  %146 = vmatprep.subr.mxu0 0.0
  %147 = vmatpush2.msra.mxu0 0.0
  %148 = vmatprep.subr.mxu0 0.0
  %149 = vmatpush2.msra.mxu0 0.0
  %150 = vmatprep.subr.mxu0 0.0
  %151 = vmatpush2.msra.mxu0 0.0
  %152 = vmatprep.subr.mxu0 0.0
  %153 = vmatpush2.msra.mxu0 0.0
  %154 = vmatprep.subr.mxu0 0.0
  %155 = vmatpush2.msra.mxu0 0.0
  %156 = vmatprep.subr.mxu0 0.0
  %157 = vmatpush2.msra.mxu0 0.0
  %158 = vmatprep.subr.mxu0 0.0
  %159 = vmatpush2.msra.mxu0 0.0
  %160 = vmatprep.subr.mxu0 0.0
  %161 = vmatpush2.msra.mxu0 0.0
  %162 = vmatprep.subr.mxu0 0.0
  %163 = vmatpush2.msra.mxu0 0.0
  %164 = vmatprep.subr.mxu0 0.0
  %165 = vmatpush2.msra.mxu0 0.0
  %166 = vmatprep.subr.mxu0 0.0
  %167 = vmatpush2.msra.mxu0 0.0
  %168 = vmatprep.subr.mxu0 0.0
  %169 = vmatpush2.msra.mxu0 0.0
  %170 = vmatprep.subr.mxu0 0.0
  %171 = vmatpush2.msra.mxu0 0.0
  %172 = vmatprep.subr.mxu0 0.0
  %173 = vmatpush2.msra.mxu0 0.0
  %174 = vmatprep.subr.mxu0 0.0
  %175 = vmatpush2.msra.mxu0 0.0
  %176 = vmatprep.mubr.f32.mxu0 0.0
  %177 = vmatmul.mubr.f32.gmra.mxu0 %v108
  %v178 = vpop.f32.mrf.mxu0
  %v179 = vadd.f32 %v63, %v178
  %v180 = vpop.f32.mrf.mxu0
  %181 = vmatprep.mubr.f32.mxu0 0.0
  %182 = vmatmul.mubr.f32.gmra.mxu0 %v110
  %v183 = vpop.f32.mrf.mxu0
  %v184 = vadd.f32 %v63, %v183
  %v185 = vpop.f32.mrf.mxu0
  %186 = vdwg.mxu0
  %v187 = vld [vmem:[%s2] sm:$0xff]
  %v188 = vld [vmem:[%s2 + $0x8] sm:$0xff]
  %v189 = vld [vmem:[%s2 + $0x10] sm:$0xff]
  %v190 = vld [vmem:[%s2 + $0x18] sm:$0xff]
  %v191 = vld [vmem:[%s8] sm:$0x1]
  %v193 = vlaneseq
  %v194 = vshrl.u32 %v193, 7
  %v195 = vsub.s32 0, %v194
  %v196 = vrot.slane %v191, %v195
  %198 = vmatprep.subr.mxu0 0.0
  %199 = vmatpush1.msra.mxu0 0.0
  %200 = vmatprep.subr.mxu0 0.0
  %201 = vmatpush1.msra.mxu0 0.0
  %202 = vmatprep.subr.mxu0 0.0
  %203 = vmatpush1.msra.mxu0 0.0
  %204 = vmatprep.subr.mxu0 0.0
  %205 = vmatpush1.msra.mxu0 0.0
  %206 = vmatprep.subr.mxu0 0.0
  %207 = vmatpush1.msra.mxu0 0.0
  %208 = vmatprep.subr.mxu0 0.0
  %209 = vmatpush1.msra.mxu0 0.0
  %210 = vmatprep.subr.mxu0 0.0
  %211 = vmatpush1.msra.mxu0 0.0
  %212 = vmatprep.subr.mxu0 0.0
  %213 = vmatpush1.msra.mxu0 0.0
  %214 = vmatprep.subr.mxu0 0.0
  %215 = vmatpush1.msra.mxu0 0.0
  %216 = vmatprep.subr.mxu0 0.0
  %217 = vmatpush1.msra.mxu0 0.0
  %218 = vmatprep.subr.mxu0 0.0
  %219 = vmatpush1.msra.mxu0 0.0
  %220 = vmatprep.subr.mxu0 0.0
  %221 = vmatpush1.msra.mxu0 0.0
  %222 = vmatprep.subr.mxu0 0.0
  %223 = vmatpush1.msra.mxu0 %v190
  %224 = vmatprep.subr.mxu0 0.0
  %225 = vmatpush1.msra.mxu0 %v189
  %226 = vmatprep.subr.mxu0 0.0
  %227 = vmatpush1.msra.mxu0 %v188
  %228 = vmatprep.subr.mxu0 0.0
  %229 = vmatpush1.msra.mxu0 %v187
  %230 = vmatprep.subr.mxu0 0.0
  %231 = vmatpush2.msra.mxu0 0.0
  %232 = vmatprep.subr.mxu0 0.0
  %233 = vmatpush2.msra.mxu0 0.0
  %234 = vmatprep.subr.mxu0 0.0
  %235 = vmatpush2.msra.mxu0 0.0
  %236 = vmatprep.subr.mxu0 0.0
  %237 = vmatpush2.msra.mxu0 0.0
  %238 = vmatprep.subr.mxu0 0.0
  %239 = vmatpush2.msra.mxu0 0.0
  %240 = vmatprep.subr.mxu0 0.0
  %241 = vmatpush2.msra.mxu0 0.0
  %242 = vmatprep.subr.mxu0 0.0
  %243 = vmatpush2.msra.mxu0 0.0
  %244 = vmatprep.subr.mxu0 0.0
  %245 = vmatpush2.msra.mxu0 0.0
  %246 = vmatprep.subr.mxu0 0.0
  %247 = vmatpush2.msra.mxu0 0.0
  %248 = vmatprep.subr.mxu0 0.0
  %249 = vmatpush2.msra.mxu0 0.0
  %250 = vmatprep.subr.mxu0 0.0
  %251 = vmatpush2.msra.mxu0 0.0
  %252 = vmatprep.subr.mxu0 0.0
  %253 = vmatpush2.msra.mxu0 0.0
  %254 = vmatprep.subr.mxu0 0.0
  %255 = vmatpush2.msra.mxu0 0.0
  %256 = vmatprep.subr.mxu0 0.0
  %257 = vmatpush2.msra.mxu0 0.0
  %258 = vmatprep.subr.mxu0 0.0
  %259 = vmatpush2.msra.mxu0 0.0
  %260 = vmatprep.subr.mxu0 0.0
  %261 = vmatpush2.msra.mxu0 0.0
  %262 = vmatprep.mubr.f32.mxu0 0.0
  %263 = vmatmul.mubr.f32.gmra.mxu0 %v108
  %v264 = vpop.f32.mrf.mxu0
  %v265 = vadd.f32 %v196, %v264
  %v266 = vpop.f32.mrf.mxu0
  %267 = vmatprep.mubr.f32.mxu0 0.0
  %268 = vmatmul.mubr.f32.gmra.mxu0 %v110
  %v269 = vpop.f32.mrf.mxu0
  %v270 = vadd.f32 %v196, %v269
  %v271 = vpop.f32.mrf.mxu0
  %272 = vdwg.mxu0
  %v273 = vld [vmem:[%s3] sm:$0xff]
  %v274 = vld [vmem:[%s3 + $0x8] sm:$0xff]
  %v275 = vld [vmem:[%s3 + $0x10] sm:$0xff]
  %v276 = vld [vmem:[%s3 + $0x18] sm:$0xff]
  %v277 = vld [vmem:[%s9] sm:$0x1]
  %v279 = vlaneseq
  %v280 = vshrl.u32 %v279, 7
  %v281 = vsub.s32 0, %v280
  %v282 = vrot.slane %v277, %v281
  %284 = vmatprep.subr.mxu0 0.0
  %285 = vmatpush1.msra.mxu0 0.0
  %286 = vmatprep.subr.mxu0 0.0
  %287 = vmatpush1.msra.mxu0 0.0
  %288 = vmatprep.subr.mxu0 0.0
  %289 = vmatpush1.msra.mxu0 0.0
  %290 = vmatprep.subr.mxu0 0.0
  %291 = vmatpush1.msra.mxu0 0.0
  %292 = vmatprep.subr.mxu0 0.0
  %293 = vmatpush1.msra.mxu0 0.0
  %294 = vmatprep.subr.mxu0 0.0
  %295 = vmatpush1.msra.mxu0 0.0
  %296 = vmatprep.subr.mxu0 0.0
  %297 = vmatpush1.msra.mxu0 0.0
  %298 = vmatprep.subr.mxu0 0.0
  %299 = vmatpush1.msra.mxu0 0.0
  %300 = vmatprep.subr.mxu0 0.0
  %301 = vmatpush1.msra.mxu0 0.0
  %302 = vmatprep.subr.mxu0 0.0
  %303 = vmatpush1.msra.mxu0 0.0
  %304 = vmatprep.subr.mxu0 0.0
  %305 = vmatpush1.msra.mxu0 0.0
  %306 = vmatprep.subr.mxu0 0.0
  %307 = vmatpush1.msra.mxu0 0.0
  %308 = vmatprep.subr.mxu0 0.0
  %309 = vmatpush1.msra.mxu0 %v276
  %310 = vmatprep.subr.mxu0 0.0
  %311 = vmatpush1.msra.mxu0 %v275
  %312 = vmatprep.subr.mxu0 0.0
  %313 = vmatpush1.msra.mxu0 %v274
  %314 = vmatprep.subr.mxu0 0.0
  %315 = vmatpush1.msra.mxu0 %v273
  %316 = vmatprep.subr.mxu0 0.0
  %317 = vmatpush2.msra.mxu0 0.0
  %318 = vmatprep.subr.mxu0 0.0
  %319 = vmatpush2.msra.mxu0 0.0
  %320 = vmatprep.subr.mxu0 0.0
  %321 = vmatpush2.msra.mxu0 0.0
  %322 = vmatprep.subr.mxu0 0.0
  %323 = vmatpush2.msra.mxu0 0.0
  %324 = vmatprep.subr.mxu0 0.0
  %325 = vmatpush2.msra.mxu0 0.0
  %326 = vmatprep.subr.mxu0 0.0
  %327 = vmatpush2.msra.mxu0 0.0
  %328 = vmatprep.subr.mxu0 0.0
  %329 = vmatpush2.msra.mxu0 0.0
  %330 = vmatprep.subr.mxu0 0.0
  %331 = vmatpush2.msra.mxu0 0.0
  %332 = vmatprep.subr.mxu0 0.0
  %333 = vmatpush2.msra.mxu0 0.0
  %334 = vmatprep.subr.mxu0 0.0
  %335 = vmatpush2.msra.mxu0 0.0
  %336 = vmatprep.subr.mxu0 0.0
  %337 = vmatpush2.msra.mxu0 0.0
  %338 = vmatprep.subr.mxu0 0.0
  %339 = vmatpush2.msra.mxu0 0.0
  %340 = vmatprep.subr.mxu0 0.0
  %341 = vmatpush2.msra.mxu0 0.0
  %342 = vmatprep.subr.mxu0 0.0
  %343 = vmatpush2.msra.mxu0 0.0
  %344 = vmatprep.subr.mxu0 0.0
  %345 = vmatpush2.msra.mxu0 0.0
  %346 = vmatprep.subr.mxu0 0.0
  %347 = vmatpush2.msra.mxu0 0.0
  %348 = vmatprep.mubr.f32.mxu0 0.0
  %349 = vmatmul.mubr.f32.gmra.mxu0 %v108
  %v350 = vpop.f32.mrf.mxu0
  %v351 = vadd.f32 %v282, %v350
  %v352 = vpop.f32.mrf.mxu0
  %353 = vmatprep.mubr.f32.mxu0 0.0
  %354 = vmatmul.mubr.f32.gmra.mxu0 %v110
  %v355 = vpop.f32.mrf.mxu0
  %v356 = vadd.f32 %v282, %v355
  %v357 = vpop.f32.mrf.mxu0
  %358 = vdwg.mxu0
  %v359 = vld [vmem:[%s4] sm:$0xff]
  %v360 = vld [vmem:[%s4 + $0x8] sm:$0xff]
  %v361 = vld [vmem:[%s4 + $0x10] sm:$0xff]
  %v362 = vld [vmem:[%s4 + $0x18] sm:$0xff]
  %v363 = vld [vmem:[%s4 + $0x20] sm:$0xff]
  %v364 = vld [vmem:[%s4 + $0x28] sm:$0xff]
  %v365 = vld [vmem:[%s4 + $0x30] sm:$0xff]
  %v366 = vld [vmem:[%s4 + $0x38] sm:$0xff]
  %v367 = vld [vmem:[%s5] sm:$0xff]
  %v368 = vld [vmem:[%s5 + $0x8] sm:$0xff]
  %v369 = vld [vmem:[%s5 + $0x10] sm:$0xff]
  %v370 = vld [vmem:[%s5 + $0x18] sm:$0xff]
  %v371 = vld [vmem:[%s5 + $0x20] sm:$0xff]
  %v372 = vld [vmem:[%s5 + $0x28] sm:$0xff]
  %v373 = vld [vmem:[%s5 + $0x30] sm:$0xff]
  %v374 = vld [vmem:[%s5 + $0x38] sm:$0xff]
  %v375 = vld [vmem:[%s6] sm:$0xff]
  %v376 = vld [vmem:[%s6 + $0x8] sm:$0xff]
  %v377 = vld [vmem:[%s6 + $0x10] sm:$0xff]
  %v378 = vld [vmem:[%s6 + $0x18] sm:$0xff]
  %v379 = vld [vmem:[%s6 + $0x20] sm:$0xff]
  %v380 = vld [vmem:[%s6 + $0x28] sm:$0xff]
  %v381 = vld [vmem:[%s6 + $0x30] sm:$0xff]
  %v382 = vld [vmem:[%s6 + $0x38] sm:$0xff]
  %v383 = vld [vmem:[%s10] sm:$0x1]
  %vm384 = vcmask 523264
  %v386 = vsel %vm384, 0.0, 0
  %388 = vmatprep.subr.mxu0 0.0
  %389 = vmatpush1.msra.mxu0 0.0
  %390 = vmatprep.subr.mxu0 0.0
  %391 = vmatpush1.msra.mxu0 0.0
  %392 = vmatprep.subr.mxu0 0.0
  %393 = vmatpush1.msra.mxu0 0.0
  %394 = vmatprep.subr.mxu0 0.0
  %395 = vmatpush1.msra.mxu0 0.0
  %396 = vmatprep.subr.mxu0 0.0
  %397 = vmatpush1.msra.mxu0 0.0
  %398 = vmatprep.subr.mxu0 0.0
  %399 = vmatpush1.msra.mxu0 0.0
  %400 = vmatprep.subr.mxu0 0.0
  %401 = vmatpush1.msra.mxu0 0.0
  %402 = vmatprep.subr.mxu0 0.0
  %403 = vmatpush1.msra.mxu0 0.0
  %404 = vmatprep.subr.mxu0 0.0
  %405 = vmatpush1.msra.mxu0 %v366
  %406 = vmatprep.subr.mxu0 0.0
  %407 = vmatpush1.msra.mxu0 %v365
  %408 = vmatprep.subr.mxu0 0.0
  %409 = vmatpush1.msra.mxu0 %v364
  %410 = vmatprep.subr.mxu0 0.0
  %411 = vmatpush1.msra.mxu0 %v363
  %412 = vmatprep.subr.mxu0 0.0
  %413 = vmatpush1.msra.mxu0 %v362
  %414 = vmatprep.subr.mxu0 0.0
  %415 = vmatpush1.msra.mxu0 %v361
  %416 = vmatprep.subr.mxu0 0.0
  %417 = vmatpush1.msra.mxu0 %v360
  %418 = vmatprep.subr.mxu0 0.0
  %419 = vmatpush1.msra.mxu0 %v359
  %420 = vmatprep.subr.mxu0 0.0
  %421 = vmatpush2.msra.mxu0 0.0
  %422 = vmatprep.subr.mxu0 0.0
  %423 = vmatpush2.msra.mxu0 0.0
  %424 = vmatprep.subr.mxu0 0.0
  %425 = vmatpush2.msra.mxu0 0.0
  %426 = vmatprep.subr.mxu0 0.0
  %427 = vmatpush2.msra.mxu0 0.0
  %428 = vmatprep.subr.mxu0 0.0
  %429 = vmatpush2.msra.mxu0 0.0
  %430 = vmatprep.subr.mxu0 0.0
  %431 = vmatpush2.msra.mxu0 0.0
  %432 = vmatprep.subr.mxu0 0.0
  %433 = vmatpush2.msra.mxu0 0.0
  %434 = vmatprep.subr.mxu0 0.0
  %435 = vmatpush2.msra.mxu0 0.0
  %436 = vmatprep.subr.mxu0 0.0
  %437 = vmatpush2.msra.mxu0 0.0
  %438 = vmatprep.subr.mxu0 0.0
  %439 = vmatpush2.msra.mxu0 0.0
  %440 = vmatprep.subr.mxu0 0.0
  %441 = vmatpush2.msra.mxu0 0.0
  %442 = vmatprep.subr.mxu0 0.0
  %443 = vmatpush2.msra.mxu0 0.0
  %444 = vmatprep.subr.mxu0 0.0
  %445 = vmatpush2.msra.mxu0 0.0
  %446 = vmatprep.subr.mxu0 0.0
  %447 = vmatpush2.msra.mxu0 0.0
  %448 = vmatprep.subr.mxu0 0.0
  %449 = vmatpush2.msra.mxu0 0.0
  %450 = vmatprep.subr.mxu0 0.0
  %451 = vmatpush2.msra.mxu0 0.0
  %452 = vmatprep.mubr.f32.mxu0 0.0
  %453 = vmatmul.mubr.f32.gmra.mxu0 %v386
  %v454 = vpop.f32.mrf.mxu0
  %v455 = vadd.f32 0.0, %v454
  %v456 = vpop.f32.mrf.mxu0
  %457 = vdwg.mxu0
  %458 = vmatprep.subr.mxu0 0.0
  %459 = vmatpush1.msra.mxu0 0.0
  %460 = vmatprep.subr.mxu0 0.0
  %461 = vmatpush1.msra.mxu0 0.0
  %462 = vmatprep.subr.mxu0 0.0
  %463 = vmatpush1.msra.mxu0 0.0
  %464 = vmatprep.subr.mxu0 0.0
  %465 = vmatpush1.msra.mxu0 0.0
  %466 = vmatprep.subr.mxu0 0.0
  %467 = vmatpush1.msra.mxu0 0.0
  %468 = vmatprep.subr.mxu0 0.0
  %469 = vmatpush1.msra.mxu0 0.0
  %470 = vmatprep.subr.mxu0 0.0
  %471 = vmatpush1.msra.mxu0 0.0
  %472 = vmatprep.subr.mxu0 0.0
  %473 = vmatpush1.msra.mxu0 0.0
  %474 = vmatprep.subr.mxu0 0.0
  %475 = vmatpush1.msra.mxu0 %v374
  %476 = vmatprep.subr.mxu0 0.0
  %477 = vmatpush1.msra.mxu0 %v373
  %478 = vmatprep.subr.mxu0 0.0
  %479 = vmatpush1.msra.mxu0 %v372
  %480 = vmatprep.subr.mxu0 0.0
  %481 = vmatpush1.msra.mxu0 %v371
  %482 = vmatprep.subr.mxu0 0.0
  %483 = vmatpush1.msra.mxu0 %v370
  %484 = vmatprep.subr.mxu0 0.0
  %485 = vmatpush1.msra.mxu0 %v369
  %486 = vmatprep.subr.mxu0 0.0
  %487 = vmatpush1.msra.mxu0 %v368
  %488 = vmatprep.subr.mxu0 0.0
  %489 = vmatpush1.msra.mxu0 %v367
  %490 = vmatprep.subr.mxu0 0.0
  %491 = vmatpush2.msra.mxu0 0.0
  %492 = vmatprep.subr.mxu0 0.0
  %493 = vmatpush2.msra.mxu0 0.0
  %494 = vmatprep.subr.mxu0 0.0
  %495 = vmatpush2.msra.mxu0 0.0
  %496 = vmatprep.subr.mxu0 0.0
  %497 = vmatpush2.msra.mxu0 0.0
  %498 = vmatprep.subr.mxu0 0.0
  %499 = vmatpush2.msra.mxu0 0.0
  %500 = vmatprep.subr.mxu0 0.0
  %501 = vmatpush2.msra.mxu0 0.0
  %502 = vmatprep.subr.mxu0 0.0
  %503 = vmatpush2.msra.mxu0 0.0
  %504 = vmatprep.subr.mxu0 0.0
  %505 = vmatpush2.msra.mxu0 0.0
  %506 = vmatprep.subr.mxu0 0.0
  %507 = vmatpush2.msra.mxu0 0.0
  %508 = vmatprep.subr.mxu0 0.0
  %509 = vmatpush2.msra.mxu0 0.0
  %510 = vmatprep.subr.mxu0 0.0
  %511 = vmatpush2.msra.mxu0 0.0
  %512 = vmatprep.subr.mxu0 0.0
  %513 = vmatpush2.msra.mxu0 0.0
  %514 = vmatprep.subr.mxu0 0.0
  %515 = vmatpush2.msra.mxu0 0.0
  %516 = vmatprep.subr.mxu0 0.0
  %517 = vmatpush2.msra.mxu0 0.0
  %518 = vmatprep.subr.mxu0 0.0
  %519 = vmatpush2.msra.mxu0 0.0
  %520 = vmatprep.subr.mxu0 0.0
  %521 = vmatpush2.msra.mxu0 0.0
  %522 = vmatprep.mubr.f32.mxu0 0.0
  %523 = vmatmul.mubr.f32.gmra.mxu0 %v386
  %v524 = vpop.f32.mrf.mxu0
  %v525 = vadd.f32 0.0, %v524
  %v526 = vpop.f32.mrf.mxu0
  %527 = vdwg.mxu0
  %v529 = vlaneseq
  %v530 = vshrl.u32 %v529, 7
  %v531 = vsub.s32 0, %v530
  %v532 = vrot.slane %v383, %v531
  %534 = vmatprep.subr.mxu0 0.0
  %535 = vmatpush1.msra.mxu0 0.0
  %536 = vmatprep.subr.mxu0 0.0
  %537 = vmatpush1.msra.mxu0 0.0
  %538 = vmatprep.subr.mxu0 0.0
  %539 = vmatpush1.msra.mxu0 0.0
  %540 = vmatprep.subr.mxu0 0.0
  %541 = vmatpush1.msra.mxu0 0.0
  %542 = vmatprep.subr.mxu0 0.0
  %543 = vmatpush1.msra.mxu0 0.0
  %544 = vmatprep.subr.mxu0 0.0
  %545 = vmatpush1.msra.mxu0 0.0
  %546 = vmatprep.subr.mxu0 0.0
  %547 = vmatpush1.msra.mxu0 0.0
  %548 = vmatprep.subr.mxu0 0.0
  %549 = vmatpush1.msra.mxu0 0.0
  %550 = vmatprep.subr.mxu0 0.0
  %551 = vmatpush1.msra.mxu0 %v382
  %552 = vmatprep.subr.mxu0 0.0
  %553 = vmatpush1.msra.mxu0 %v381
  %554 = vmatprep.subr.mxu0 0.0
  %555 = vmatpush1.msra.mxu0 %v380
  %556 = vmatprep.subr.mxu0 0.0
  %557 = vmatpush1.msra.mxu0 %v379
  %558 = vmatprep.subr.mxu0 0.0
  %559 = vmatpush1.msra.mxu0 %v378
  %560 = vmatprep.subr.mxu0 0.0
  %561 = vmatpush1.msra.mxu0 %v377
  %562 = vmatprep.subr.mxu0 0.0
  %563 = vmatpush1.msra.mxu0 %v376
  %564 = vmatprep.subr.mxu0 0.0
  %565 = vmatpush1.msra.mxu0 %v375
  %566 = vmatprep.subr.mxu0 0.0
  %567 = vmatpush2.msra.mxu0 0.0
  %568 = vmatprep.subr.mxu0 0.0
  %569 = vmatpush2.msra.mxu0 0.0
  %570 = vmatprep.subr.mxu0 0.0
  %571 = vmatpush2.msra.mxu0 0.0
  %572 = vmatprep.subr.mxu0 0.0
  %573 = vmatpush2.msra.mxu0 0.0
  %574 = vmatprep.subr.mxu0 0.0
  %575 = vmatpush2.msra.mxu0 0.0
  %576 = vmatprep.subr.mxu0 0.0
  %577 = vmatpush2.msra.mxu0 0.0
  %578 = vmatprep.subr.mxu0 0.0
  %579 = vmatpush2.msra.mxu0 0.0
  %580 = vmatprep.subr.mxu0 0.0
  %581 = vmatpush2.msra.mxu0 0.0
  %582 = vmatprep.subr.mxu0 0.0
  %583 = vmatpush2.msra.mxu0 0.0
  %584 = vmatprep.subr.mxu0 0.0
  %585 = vmatpush2.msra.mxu0 0.0
  %586 = vmatprep.subr.mxu0 0.0
  %587 = vmatpush2.msra.mxu0 0.0
  %588 = vmatprep.subr.mxu0 0.0
  %589 = vmatpush2.msra.mxu0 0.0
  %590 = vmatprep.subr.mxu0 0.0
  %591 = vmatpush2.msra.mxu0 0.0
  %592 = vmatprep.subr.mxu0 0.0
  %593 = vmatpush2.msra.mxu0 0.0
  %594 = vmatprep.subr.mxu0 0.0
  %595 = vmatpush2.msra.mxu0 0.0
  %596 = vmatprep.subr.mxu0 0.0
  %597 = vmatpush2.msra.mxu0 0.0
  %598 = vmatprep.mubr.f32.mxu0 0.0
  %599 = vmatmul.mubr.f32.gmra.mxu0 %v386
  %v600 = vpop.f32.mrf.mxu0
  %v601 = vadd.f32 %v532, %v600
  %v602 = vpop.f32.mrf.mxu0
  %603 = vdwg.mxu0
  %v604 = vadd.f32 %v179, %v455
  %v605 = vxor.u32 %v604, 2147483648
  %v606 = vmul.f32 %v605, 1.442695
  %v607 = vpow.pop %v606
  %v608 = vadd.f32 %v607, 1.0
  %v609 = vrcp.pop %v608
  %v610 = vmul.f32 1.0, %v609
  %v611 = vadd.f32 %v265, %v525
  %v612 = vxor.u32 %v611, 2147483648
  %v613 = vmul.f32 %v612, 1.442695
  %v614 = vpow.pop %v613
  %v615 = vadd.f32 %v614, 1.0
  %v616 = vrcp.pop %v615
  %v617 = vmul.f32 1.0, %v616
  %v618 = vmul.f32 %v610, %v601
  %v619 = vadd.f32 %v351, %v618
  %v620 = vtanh.pop %v619
  %v621 = vsub.f32 1.0, %v617
  %v622 = vmul.f32 %v621, %v620
  %v623 = vmul.f32 %v617, 0.0
  %v624 = vadd.f32 %v622, %v623
  %v626 = vsel %vm384, %v624, 0
  %628 = vmatprep.subr.mxu0 0.0
  %629 = vmatpush1.msra.mxu0 0.0
  %630 = vmatprep.subr.mxu0 0.0
  %631 = vmatpush1.msra.mxu0 0.0
  %632 = vmatprep.subr.mxu0 0.0
  %633 = vmatpush1.msra.mxu0 0.0
  %634 = vmatprep.subr.mxu0 0.0
  %635 = vmatpush1.msra.mxu0 0.0
  %636 = vmatprep.subr.mxu0 0.0
  %637 = vmatpush1.msra.mxu0 0.0
  %638 = vmatprep.subr.mxu0 0.0
  %639 = vmatpush1.msra.mxu0 0.0
  %640 = vmatprep.subr.mxu0 0.0
  %641 = vmatpush1.msra.mxu0 0.0
  %642 = vmatprep.subr.mxu0 0.0
  %643 = vmatpush1.msra.mxu0 0.0
  %644 = vmatprep.subr.mxu0 0.0
  %645 = vmatpush1.msra.mxu0 %v366
  %646 = vmatprep.subr.mxu0 0.0
  %647 = vmatpush1.msra.mxu0 %v365
  %648 = vmatprep.subr.mxu0 0.0
  %649 = vmatpush1.msra.mxu0 %v364
  %650 = vmatprep.subr.mxu0 0.0
  %651 = vmatpush1.msra.mxu0 %v363
  %652 = vmatprep.subr.mxu0 0.0
  %653 = vmatpush1.msra.mxu0 %v362
  %654 = vmatprep.subr.mxu0 0.0
  %655 = vmatpush1.msra.mxu0 %v361
  %656 = vmatprep.subr.mxu0 0.0
  %657 = vmatpush1.msra.mxu0 %v360
  %658 = vmatprep.subr.mxu0 0.0
  %659 = vmatpush1.msra.mxu0 %v359
  %660 = vmatprep.subr.mxu0 0.0
  %661 = vmatpush2.msra.mxu0 0.0
  %662 = vmatprep.subr.mxu0 0.0
  %663 = vmatpush2.msra.mxu0 0.0
  %664 = vmatprep.subr.mxu0 0.0
  %665 = vmatpush2.msra.mxu0 0.0
  %666 = vmatprep.subr.mxu0 0.0
  %667 = vmatpush2.msra.mxu0 0.0
  %668 = vmatprep.subr.mxu0 0.0
  %669 = vmatpush2.msra.mxu0 0.0
  %670 = vmatprep.subr.mxu0 0.0
  %671 = vmatpush2.msra.mxu0 0.0
  %672 = vmatprep.subr.mxu0 0.0
  %673 = vmatpush2.msra.mxu0 0.0
  %674 = vmatprep.subr.mxu0 0.0
  %675 = vmatpush2.msra.mxu0 0.0
  %676 = vmatprep.subr.mxu0 0.0
  %677 = vmatpush2.msra.mxu0 0.0
  %678 = vmatprep.subr.mxu0 0.0
  %679 = vmatpush2.msra.mxu0 0.0
  %680 = vmatprep.subr.mxu0 0.0
  %681 = vmatpush2.msra.mxu0 0.0
  %682 = vmatprep.subr.mxu0 0.0
  %683 = vmatpush2.msra.mxu0 0.0
  %684 = vmatprep.subr.mxu0 0.0
  %685 = vmatpush2.msra.mxu0 0.0
  %686 = vmatprep.subr.mxu0 0.0
  %687 = vmatpush2.msra.mxu0 0.0
  %688 = vmatprep.subr.mxu0 0.0
  %689 = vmatpush2.msra.mxu0 0.0
  %690 = vmatprep.subr.mxu0 0.0
  %691 = vmatpush2.msra.mxu0 0.0
  %692 = vmatprep.mubr.f32.mxu0 0.0
  %693 = vmatmul.mubr.f32.gmra.mxu0 %v626
  %v694 = vpop.f32.mrf.mxu0
  %v695 = vadd.f32 0.0, %v694
  %v696 = vpop.f32.mrf.mxu0
  %697 = vdwg.mxu0
  %698 = vmatprep.subr.mxu0 0.0
  %699 = vmatpush1.msra.mxu0 0.0
  %700 = vmatprep.subr.mxu0 0.0
  %701 = vmatpush1.msra.mxu0 0.0
  %702 = vmatprep.subr.mxu0 0.0
  %703 = vmatpush1.msra.mxu0 0.0
  %704 = vmatprep.subr.mxu0 0.0
  %705 = vmatpush1.msra.mxu0 0.0
  %706 = vmatprep.subr.mxu0 0.0
  %707 = vmatpush1.msra.mxu0 0.0
  %708 = vmatprep.subr.mxu0 0.0
  %709 = vmatpush1.msra.mxu0 0.0
  %710 = vmatprep.subr.mxu0 0.0
  %711 = vmatpush1.msra.mxu0 0.0
  %712 = vmatprep.subr.mxu0 0.0
  %713 = vmatpush1.msra.mxu0 0.0
  %714 = vmatprep.subr.mxu0 0.0
  %715 = vmatpush1.msra.mxu0 %v374
  %716 = vmatprep.subr.mxu0 0.0
  %717 = vmatpush1.msra.mxu0 %v373
  %718 = vmatprep.subr.mxu0 0.0
  %719 = vmatpush1.msra.mxu0 %v372
  %720 = vmatprep.subr.mxu0 0.0
  %721 = vmatpush1.msra.mxu0 %v371
  %722 = vmatprep.subr.mxu0 0.0
  %723 = vmatpush1.msra.mxu0 %v370
  %724 = vmatprep.subr.mxu0 0.0
  %725 = vmatpush1.msra.mxu0 %v369
  %726 = vmatprep.subr.mxu0 0.0
  %727 = vmatpush1.msra.mxu0 %v368
  %728 = vmatprep.subr.mxu0 0.0
  %729 = vmatpush1.msra.mxu0 %v367
  %730 = vmatprep.subr.mxu0 0.0
  %731 = vmatpush2.msra.mxu0 0.0
  %732 = vmatprep.subr.mxu0 0.0
  %733 = vmatpush2.msra.mxu0 0.0
  %734 = vmatprep.subr.mxu0 0.0
  %735 = vmatpush2.msra.mxu0 0.0
  %736 = vmatprep.subr.mxu0 0.0
  %737 = vmatpush2.msra.mxu0 0.0
  %738 = vmatprep.subr.mxu0 0.0
  %739 = vmatpush2.msra.mxu0 0.0
  %740 = vmatprep.subr.mxu0 0.0
  %741 = vmatpush2.msra.mxu0 0.0
  %742 = vmatprep.subr.mxu0 0.0
  %743 = vmatpush2.msra.mxu0 0.0
  %744 = vmatprep.subr.mxu0 0.0
  %745 = vmatpush2.msra.mxu0 0.0
  %746 = vmatprep.subr.mxu0 0.0
  %747 = vmatpush2.msra.mxu0 0.0
  %748 = vmatprep.subr.mxu0 0.0
  %749 = vmatpush2.msra.mxu0 0.0
  %750 = vmatprep.subr.mxu0 0.0
  %751 = vmatpush2.msra.mxu0 0.0
  %752 = vmatprep.subr.mxu0 0.0
  %753 = vmatpush2.msra.mxu0 0.0
  %754 = vmatprep.subr.mxu0 0.0
  %755 = vmatpush2.msra.mxu0 0.0
  %756 = vmatprep.subr.mxu0 0.0
  %757 = vmatpush2.msra.mxu0 0.0
  %758 = vmatprep.subr.mxu0 0.0
  %759 = vmatpush2.msra.mxu0 0.0
  %760 = vmatprep.subr.mxu0 0.0
  %761 = vmatpush2.msra.mxu0 0.0
  %762 = vmatprep.mubr.f32.mxu0 0.0
  %763 = vmatmul.mubr.f32.gmra.mxu0 %v626
  %v764 = vpop.f32.mrf.mxu0
  %v765 = vadd.f32 0.0, %v764
  %v766 = vpop.f32.mrf.mxu0
  %767 = vdwg.mxu0
  %768 = vmatprep.subr.mxu0 0.0
  %769 = vmatpush1.msra.mxu0 0.0
  %770 = vmatprep.subr.mxu0 0.0
  %771 = vmatpush1.msra.mxu0 0.0
  %772 = vmatprep.subr.mxu0 0.0
  %773 = vmatpush1.msra.mxu0 0.0
  %774 = vmatprep.subr.mxu0 0.0
  %775 = vmatpush1.msra.mxu0 0.0
  %776 = vmatprep.subr.mxu0 0.0
  %777 = vmatpush1.msra.mxu0 0.0
  %778 = vmatprep.subr.mxu0 0.0
  %779 = vmatpush1.msra.mxu0 0.0
  %780 = vmatprep.subr.mxu0 0.0
  %781 = vmatpush1.msra.mxu0 0.0
  %782 = vmatprep.subr.mxu0 0.0
  %783 = vmatpush1.msra.mxu0 0.0
  %784 = vmatprep.subr.mxu0 0.0
  %785 = vmatpush1.msra.mxu0 %v382
  %786 = vmatprep.subr.mxu0 0.0
  %787 = vmatpush1.msra.mxu0 %v381
  %788 = vmatprep.subr.mxu0 0.0
  %789 = vmatpush1.msra.mxu0 %v380
  %790 = vmatprep.subr.mxu0 0.0
  %791 = vmatpush1.msra.mxu0 %v379
  %792 = vmatprep.subr.mxu0 0.0
  %793 = vmatpush1.msra.mxu0 %v378
  %794 = vmatprep.subr.mxu0 0.0
  %795 = vmatpush1.msra.mxu0 %v377
  %796 = vmatprep.subr.mxu0 0.0
  %797 = vmatpush1.msra.mxu0 %v376
  %798 = vmatprep.subr.mxu0 0.0
  %799 = vmatpush1.msra.mxu0 %v375
  %800 = vmatprep.subr.mxu0 0.0
  %801 = vmatpush2.msra.mxu0 0.0
  %802 = vmatprep.subr.mxu0 0.0
  %803 = vmatpush2.msra.mxu0 0.0
  %804 = vmatprep.subr.mxu0 0.0
  %805 = vmatpush2.msra.mxu0 0.0
  %806 = vmatprep.subr.mxu0 0.0
  %807 = vmatpush2.msra.mxu0 0.0
  %808 = vmatprep.subr.mxu0 0.0
  %809 = vmatpush2.msra.mxu0 0.0
  %810 = vmatprep.subr.mxu0 0.0
  %811 = vmatpush2.msra.mxu0 0.0
  %812 = vmatprep.subr.mxu0 0.0
  %813 = vmatpush2.msra.mxu0 0.0
  %814 = vmatprep.subr.mxu0 0.0
  %815 = vmatpush2.msra.mxu0 0.0
  %816 = vmatprep.subr.mxu0 0.0
  %817 = vmatpush2.msra.mxu0 0.0
  %818 = vmatprep.subr.mxu0 0.0
  %819 = vmatpush2.msra.mxu0 0.0
  %820 = vmatprep.subr.mxu0 0.0
  %821 = vmatpush2.msra.mxu0 0.0
  %822 = vmatprep.subr.mxu0 0.0
  %823 = vmatpush2.msra.mxu0 0.0
  %824 = vmatprep.subr.mxu0 0.0
  %825 = vmatpush2.msra.mxu0 0.0
  %826 = vmatprep.subr.mxu0 0.0
  %827 = vmatpush2.msra.mxu0 0.0
  %828 = vmatprep.subr.mxu0 0.0
  %829 = vmatpush2.msra.mxu0 0.0
  %830 = vmatprep.subr.mxu0 0.0
  %831 = vmatpush2.msra.mxu0 0.0
  %832 = vmatprep.mubr.f32.mxu0 0.0
  %833 = vmatmul.mubr.f32.gmra.mxu0 %v626
  %v834 = vpop.f32.mrf.mxu0
  %v835 = vadd.f32 %v532, %v834
  %v836 = vpop.f32.mrf.mxu0
  %837 = vdwg.mxu0
  %v839 = vrot.slane %v695, 6
  %v841 = vadd.f32 %v179, %v839
  %v842 = vxor.u32 %v841, 2147483648
  %v843 = vmul.f32 %v842, 1.442695
  %v844 = vpow.pop %v843
  %v845 = vadd.f32 %v844, 1.0
  %v846 = vrcp.pop %v845
  %v847 = vmul.f32 1.0, %v846
  %v849 = vrot.slane %v765, 6
  %v851 = vadd.f32 %v265, %v849
  %v852 = vxor.u32 %v851, 2147483648
  %v853 = vmul.f32 %v852, 1.442695
  %v854 = vpow.pop %v853
  %v855 = vadd.f32 %v854, 1.0
  %v856 = vrcp.pop %v855
  %v857 = vmul.f32 1.0, %v856
  %v859 = vrot.slane %v835, 6
  %v861 = vmul.f32 %v847, %v859
  %v862 = vadd.f32 %v351, %v861
  %v863 = vtanh.pop %v862
  %v864 = vsub.f32 1.0, %v857
  %v865 = vmul.f32 %v864, %v863
  %v866 = vrot.slane %v624, 6
  %v868 = vmul.f32 %v857, %v866
  %v869 = vadd.f32 %v865, %v868
  %v871 = vrot.slane %v869, 2
  %v872 = vsel %vm384, %v871, 0
  %874 = vmatprep.subr.mxu0 0.0
  %875 = vmatpush1.msra.mxu0 0.0
  %876 = vmatprep.subr.mxu0 0.0
  %877 = vmatpush1.msra.mxu0 0.0
  %878 = vmatprep.subr.mxu0 0.0
  %879 = vmatpush1.msra.mxu0 0.0
  %880 = vmatprep.subr.mxu0 0.0
  %881 = vmatpush1.msra.mxu0 0.0
  %882 = vmatprep.subr.mxu0 0.0
  %883 = vmatpush1.msra.mxu0 0.0
  %884 = vmatprep.subr.mxu0 0.0
  %885 = vmatpush1.msra.mxu0 0.0
  %886 = vmatprep.subr.mxu0 0.0
  %887 = vmatpush1.msra.mxu0 0.0
  %888 = vmatprep.subr.mxu0 0.0
  %889 = vmatpush1.msra.mxu0 0.0
  %890 = vmatprep.subr.mxu0 0.0
  %891 = vmatpush1.msra.mxu0 %v366
  %892 = vmatprep.subr.mxu0 0.0
  %893 = vmatpush1.msra.mxu0 %v365
  %894 = vmatprep.subr.mxu0 0.0
  %895 = vmatpush1.msra.mxu0 %v364
  %896 = vmatprep.subr.mxu0 0.0
  %897 = vmatpush1.msra.mxu0 %v363
  %898 = vmatprep.subr.mxu0 0.0
  %899 = vmatpush1.msra.mxu0 %v362
  %900 = vmatprep.subr.mxu0 0.0
  %901 = vmatpush1.msra.mxu0 %v361
  %902 = vmatprep.subr.mxu0 0.0
  %903 = vmatpush1.msra.mxu0 %v360
  %904 = vmatprep.subr.mxu0 0.0
  %905 = vmatpush1.msra.mxu0 %v359
  %906 = vmatprep.subr.mxu0 0.0
  %907 = vmatpush2.msra.mxu0 0.0
  %908 = vmatprep.subr.mxu0 0.0
  %909 = vmatpush2.msra.mxu0 0.0
  %910 = vmatprep.subr.mxu0 0.0
  %911 = vmatpush2.msra.mxu0 0.0
  %912 = vmatprep.subr.mxu0 0.0
  %913 = vmatpush2.msra.mxu0 0.0
  %914 = vmatprep.subr.mxu0 0.0
  %915 = vmatpush2.msra.mxu0 0.0
  %916 = vmatprep.subr.mxu0 0.0
  %917 = vmatpush2.msra.mxu0 0.0
  %918 = vmatprep.subr.mxu0 0.0
  %919 = vmatpush2.msra.mxu0 0.0
  %920 = vmatprep.subr.mxu0 0.0
  %921 = vmatpush2.msra.mxu0 0.0
  %922 = vmatprep.subr.mxu0 0.0
  %923 = vmatpush2.msra.mxu0 0.0
  %924 = vmatprep.subr.mxu0 0.0
  %925 = vmatpush2.msra.mxu0 0.0
  %926 = vmatprep.subr.mxu0 0.0
  %927 = vmatpush2.msra.mxu0 0.0
  %928 = vmatprep.subr.mxu0 0.0
  %929 = vmatpush2.msra.mxu0 0.0
  %930 = vmatprep.subr.mxu0 0.0
  %931 = vmatpush2.msra.mxu0 0.0
  %932 = vmatprep.subr.mxu0 0.0
  %933 = vmatpush2.msra.mxu0 0.0
  %934 = vmatprep.subr.mxu0 0.0
  %935 = vmatpush2.msra.mxu0 0.0
  %936 = vmatprep.subr.mxu0 0.0
  %937 = vmatpush2.msra.mxu0 0.0
  %938 = vmatprep.mubr.f32.mxu0 0.0
  %939 = vmatmul.mubr.f32.gmra.mxu0 %v872
  %v940 = vpop.f32.mrf.mxu0
  %v941 = vadd.f32 0.0, %v940
  %v942 = vpop.f32.mrf.mxu0
  %943 = vdwg.mxu0
  %944 = vmatprep.subr.mxu0 0.0
  %945 = vmatpush1.msra.mxu0 0.0
  %946 = vmatprep.subr.mxu0 0.0
  %947 = vmatpush1.msra.mxu0 0.0
  %948 = vmatprep.subr.mxu0 0.0
  %949 = vmatpush1.msra.mxu0 0.0
  %950 = vmatprep.subr.mxu0 0.0
  %951 = vmatpush1.msra.mxu0 0.0
  %952 = vmatprep.subr.mxu0 0.0
  %953 = vmatpush1.msra.mxu0 0.0
  %954 = vmatprep.subr.mxu0 0.0
  %955 = vmatpush1.msra.mxu0 0.0
  %956 = vmatprep.subr.mxu0 0.0
  %957 = vmatpush1.msra.mxu0 0.0
  %958 = vmatprep.subr.mxu0 0.0
  %959 = vmatpush1.msra.mxu0 0.0
  %960 = vmatprep.subr.mxu0 0.0
  %961 = vmatpush1.msra.mxu0 %v374
  %962 = vmatprep.subr.mxu0 0.0
  %963 = vmatpush1.msra.mxu0 %v373
  %964 = vmatprep.subr.mxu0 0.0
  %965 = vmatpush1.msra.mxu0 %v372
  %966 = vmatprep.subr.mxu0 0.0
  %967 = vmatpush1.msra.mxu0 %v371
  %968 = vmatprep.subr.mxu0 0.0
  %969 = vmatpush1.msra.mxu0 %v370
  %970 = vmatprep.subr.mxu0 0.0
  %971 = vmatpush1.msra.mxu0 %v369
  %972 = vmatprep.subr.mxu0 0.0
  %973 = vmatpush1.msra.mxu0 %v368
  %974 = vmatprep.subr.mxu0 0.0
  %975 = vmatpush1.msra.mxu0 %v367
  %976 = vmatprep.subr.mxu0 0.0
  %977 = vmatpush2.msra.mxu0 0.0
  %978 = vmatprep.subr.mxu0 0.0
  %979 = vmatpush2.msra.mxu0 0.0
  %980 = vmatprep.subr.mxu0 0.0
  %981 = vmatpush2.msra.mxu0 0.0
  %982 = vmatprep.subr.mxu0 0.0
  %983 = vmatpush2.msra.mxu0 0.0
  %984 = vmatprep.subr.mxu0 0.0
  %985 = vmatpush2.msra.mxu0 0.0
  %986 = vmatprep.subr.mxu0 0.0
  %987 = vmatpush2.msra.mxu0 0.0
  %988 = vmatprep.subr.mxu0 0.0
  %989 = vmatpush2.msra.mxu0 0.0
  %990 = vmatprep.subr.mxu0 0.0
  %991 = vmatpush2.msra.mxu0 0.0
  %992 = vmatprep.subr.mxu0 0.0
  %993 = vmatpush2.msra.mxu0 0.0
  %994 = vmatprep.subr.mxu0 0.0
  %995 = vmatpush2.msra.mxu0 0.0
  %996 = vmatprep.subr.mxu0 0.0
  %997 = vmatpush2.msra.mxu0 0.0
  %998 = vmatprep.subr.mxu0 0.0
  %999 = vmatpush2.msra.mxu0 0.0
  %1000 = vmatprep.subr.mxu0 0.0
  %1001 = vmatpush2.msra.mxu0 0.0
  %1002 = vmatprep.subr.mxu0 0.0
  %1003 = vmatpush2.msra.mxu0 0.0
  %1004 = vmatprep.subr.mxu0 0.0
  %1005 = vmatpush2.msra.mxu0 0.0
  %1006 = vmatprep.subr.mxu0 0.0
  %1007 = vmatpush2.msra.mxu0 0.0
  %1008 = vmatprep.mubr.f32.mxu0 0.0
  %1009 = vmatmul.mubr.f32.gmra.mxu0 %v872
  %v1010 = vpop.f32.mrf.mxu0
  %v1011 = vadd.f32 0.0, %v1010
  %v1012 = vpop.f32.mrf.mxu0
  %1013 = vdwg.mxu0
  %1014 = vmatprep.subr.mxu0 0.0
  %1015 = vmatpush1.msra.mxu0 0.0
  %1016 = vmatprep.subr.mxu0 0.0
  %1017 = vmatpush1.msra.mxu0 0.0
  %1018 = vmatprep.subr.mxu0 0.0
  %1019 = vmatpush1.msra.mxu0 0.0
  %1020 = vmatprep.subr.mxu0 0.0
  %1021 = vmatpush1.msra.mxu0 0.0
  %1022 = vmatprep.subr.mxu0 0.0
  %1023 = vmatpush1.msra.mxu0 0.0
  %1024 = vmatprep.subr.mxu0 0.0
  %1025 = vmatpush1.msra.mxu0 0.0
  %1026 = vmatprep.subr.mxu0 0.0
  %1027 = vmatpush1.msra.mxu0 0.0
  %1028 = vmatprep.subr.mxu0 0.0
  %1029 = vmatpush1.msra.mxu0 0.0
  %1030 = vmatprep.subr.mxu0 0.0
  %1031 = vmatpush1.msra.mxu0 %v382
  %1032 = vmatprep.subr.mxu0 0.0
  %1033 = vmatpush1.msra.mxu0 %v381
  %1034 = vmatprep.subr.mxu0 0.0
  %1035 = vmatpush1.msra.mxu0 %v380
  %1036 = vmatprep.subr.mxu0 0.0
  %1037 = vmatpush1.msra.mxu0 %v379
  %1038 = vmatprep.subr.mxu0 0.0
  %1039 = vmatpush1.msra.mxu0 %v378
  %1040 = vmatprep.subr.mxu0 0.0
  %1041 = vmatpush1.msra.mxu0 %v377
  %1042 = vmatprep.subr.mxu0 0.0
  %1043 = vmatpush1.msra.mxu0 %v376
  %1044 = vmatprep.subr.mxu0 0.0
  %1045 = vmatpush1.msra.mxu0 %v375
  %1046 = vmatprep.subr.mxu0 0.0
  %1047 = vmatpush2.msra.mxu0 0.0
  %1048 = vmatprep.subr.mxu0 0.0
  %1049 = vmatpush2.msra.mxu0 0.0
  %1050 = vmatprep.subr.mxu0 0.0
  %1051 = vmatpush2.msra.mxu0 0.0
  %1052 = vmatprep.subr.mxu0 0.0
  %1053 = vmatpush2.msra.mxu0 0.0
  %1054 = vmatprep.subr.mxu0 0.0
  %1055 = vmatpush2.msra.mxu0 0.0
  %1056 = vmatprep.subr.mxu0 0.0
  %1057 = vmatpush2.msra.mxu0 0.0
  %1058 = vmatprep.subr.mxu0 0.0
  %1059 = vmatpush2.msra.mxu0 0.0
  %1060 = vmatprep.subr.mxu0 0.0
  %1061 = vmatpush2.msra.mxu0 0.0
  %1062 = vmatprep.subr.mxu0 0.0
  %1063 = vmatpush2.msra.mxu0 0.0
  %1064 = vmatprep.subr.mxu0 0.0
  %1065 = vmatpush2.msra.mxu0 0.0
  %1066 = vmatprep.subr.mxu0 0.0
  %1067 = vmatpush2.msra.mxu0 0.0
  %1068 = vmatprep.subr.mxu0 0.0
  %1069 = vmatpush2.msra.mxu0 0.0
  %1070 = vmatprep.subr.mxu0 0.0
  %1071 = vmatpush2.msra.mxu0 0.0
  %1072 = vmatprep.subr.mxu0 0.0
  %1073 = vmatpush2.msra.mxu0 0.0
  %1074 = vmatprep.subr.mxu0 0.0
  %1075 = vmatpush2.msra.mxu0 0.0
  %1076 = vmatprep.subr.mxu0 0.0
  %1077 = vmatpush2.msra.mxu0 0.0
  %1078 = vmatprep.mubr.f32.mxu0 0.0
  %1079 = vmatmul.mubr.f32.gmra.mxu0 %v872
  %v1080 = vpop.f32.mrf.mxu0
  %v1081 = vadd.f32 %v532, %v1080
  %v1082 = vpop.f32.mrf.mxu0
  %1083 = vdwg.mxu0
  %v1085 = vrot.slane %v941, 4
  %v1087 = vadd.f32 %v179, %v1085
  %v1088 = vxor.u32 %v1087, 2147483648
  %v1089 = vmul.f32 %v1088, 1.442695
  %v1090 = vpow.pop %v1089
  %v1091 = vadd.f32 %v1090, 1.0
  %v1092 = vrcp.pop %v1091
  %v1093 = vmul.f32 1.0, %v1092
  %v1095 = vrot.slane %v1011, 4
  %v1097 = vadd.f32 %v265, %v1095
  %v1098 = vxor.u32 %v1097, 2147483648
  %v1099 = vmul.f32 %v1098, 1.442695
  %v1100 = vpow.pop %v1099
  %v1101 = vadd.f32 %v1100, 1.0
  %v1102 = vrcp.pop %v1101
  %v1103 = vmul.f32 1.0, %v1102
  %v1105 = vrot.slane %v1081, 4
  %v1107 = vmul.f32 %v1093, %v1105
  %v1108 = vadd.f32 %v351, %v1107
  %v1109 = vtanh.pop %v1108
  %v1110 = vsub.f32 1.0, %v1103
  %v1111 = vmul.f32 %v1110, %v1109
  %v1112 = vrot.slane %v869, 6
  %v1114 = vmul.f32 %v1103, %v1112
  %v1115 = vadd.f32 %v1111, %v1114
  %v1117 = vrot.slane %v1115, 4
  %v1118 = vsel %vm384, %v1117, 0
  %1120 = vmatprep.subr.mxu0 0.0
  %1121 = vmatpush1.msra.mxu0 0.0
  %1122 = vmatprep.subr.mxu0 0.0
  %1123 = vmatpush1.msra.mxu0 0.0
  %1124 = vmatprep.subr.mxu0 0.0
  %1125 = vmatpush1.msra.mxu0 0.0
  %1126 = vmatprep.subr.mxu0 0.0
  %1127 = vmatpush1.msra.mxu0 0.0
  %1128 = vmatprep.subr.mxu0 0.0
  %1129 = vmatpush1.msra.mxu0 0.0
  %1130 = vmatprep.subr.mxu0 0.0
  %1131 = vmatpush1.msra.mxu0 0.0
  %1132 = vmatprep.subr.mxu0 0.0
  %1133 = vmatpush1.msra.mxu0 0.0
  %1134 = vmatprep.subr.mxu0 0.0
  %1135 = vmatpush1.msra.mxu0 0.0
  %1136 = vmatprep.subr.mxu0 0.0
  %1137 = vmatpush1.msra.mxu0 %v366
  %1138 = vmatprep.subr.mxu0 0.0
  %1139 = vmatpush1.msra.mxu0 %v365
  %1140 = vmatprep.subr.mxu0 0.0
  %1141 = vmatpush1.msra.mxu0 %v364
  %1142 = vmatprep.subr.mxu0 0.0
  %1143 = vmatpush1.msra.mxu0 %v363
  %1144 = vmatprep.subr.mxu0 0.0
  %1145 = vmatpush1.msra.mxu0 %v362
  %1146 = vmatprep.subr.mxu0 0.0
  %1147 = vmatpush1.msra.mxu0 %v361
  %1148 = vmatprep.subr.mxu0 0.0
  %1149 = vmatpush1.msra.mxu0 %v360
  %1150 = vmatprep.subr.mxu0 0.0
  %1151 = vmatpush1.msra.mxu0 %v359
  %1152 = vmatprep.subr.mxu0 0.0
  %1153 = vmatpush2.msra.mxu0 0.0
  %1154 = vmatprep.subr.mxu0 0.0
  %1155 = vmatpush2.msra.mxu0 0.0
  %1156 = vmatprep.subr.mxu0 0.0
  %1157 = vmatpush2.msra.mxu0 0.0
  %1158 = vmatprep.subr.mxu0 0.0
  %1159 = vmatpush2.msra.mxu0 0.0
  %1160 = vmatprep.subr.mxu0 0.0
  %1161 = vmatpush2.msra.mxu0 0.0
  %1162 = vmatprep.subr.mxu0 0.0
  %1163 = vmatpush2.msra.mxu0 0.0
  %1164 = vmatprep.subr.mxu0 0.0
  %1165 = vmatpush2.msra.mxu0 0.0
  %1166 = vmatprep.subr.mxu0 0.0
  %1167 = vmatpush2.msra.mxu0 0.0
  %1168 = vmatprep.subr.mxu0 0.0
  %1169 = vmatpush2.msra.mxu0 0.0
  %1170 = vmatprep.subr.mxu0 0.0
  %1171 = vmatpush2.msra.mxu0 0.0
  %1172 = vmatprep.subr.mxu0 0.0
  %1173 = vmatpush2.msra.mxu0 0.0
  %1174 = vmatprep.subr.mxu0 0.0
  %1175 = vmatpush2.msra.mxu0 0.0
  %1176 = vmatprep.subr.mxu0 0.0
  %1177 = vmatpush2.msra.mxu0 0.0
  %1178 = vmatprep.subr.mxu0 0.0
  %1179 = vmatpush2.msra.mxu0 0.0
  %1180 = vmatprep.subr.mxu0 0.0
  %1181 = vmatpush2.msra.mxu0 0.0
  %1182 = vmatprep.subr.mxu0 0.0
  %1183 = vmatpush2.msra.mxu0 0.0
  %1184 = vmatprep.mubr.f32.mxu0 0.0
  %1185 = vmatmul.mubr.f32.gmra.mxu0 %v1118
  %v1186 = vpop.f32.mrf.mxu0
  %v1187 = vadd.f32 0.0, %v1186
  %v1188 = vpop.f32.mrf.mxu0
  %1189 = vdwg.mxu0
  %1190 = vmatprep.subr.mxu0 0.0
  %1191 = vmatpush1.msra.mxu0 0.0
  %1192 = vmatprep.subr.mxu0 0.0
  %1193 = vmatpush1.msra.mxu0 0.0
  %1194 = vmatprep.subr.mxu0 0.0
  %1195 = vmatpush1.msra.mxu0 0.0
  %1196 = vmatprep.subr.mxu0 0.0
  %1197 = vmatpush1.msra.mxu0 0.0
  %1198 = vmatprep.subr.mxu0 0.0
  %1199 = vmatpush1.msra.mxu0 0.0
  %1200 = vmatprep.subr.mxu0 0.0
  %1201 = vmatpush1.msra.mxu0 0.0
  %1202 = vmatprep.subr.mxu0 0.0
  %1203 = vmatpush1.msra.mxu0 0.0
  %1204 = vmatprep.subr.mxu0 0.0
  %1205 = vmatpush1.msra.mxu0 0.0
  %1206 = vmatprep.subr.mxu0 0.0
  %1207 = vmatpush1.msra.mxu0 %v374
  %1208 = vmatprep.subr.mxu0 0.0
  %1209 = vmatpush1.msra.mxu0 %v373
  %1210 = vmatprep.subr.mxu0 0.0
  %1211 = vmatpush1.msra.mxu0 %v372
  %1212 = vmatprep.subr.mxu0 0.0
  %1213 = vmatpush1.msra.mxu0 %v371
  %1214 = vmatprep.subr.mxu0 0.0
  %1215 = vmatpush1.msra.mxu0 %v370
  %1216 = vmatprep.subr.mxu0 0.0
  %1217 = vmatpush1.msra.mxu0 %v369
  %1218 = vmatprep.subr.mxu0 0.0
  %1219 = vmatpush1.msra.mxu0 %v368
  %1220 = vmatprep.subr.mxu0 0.0
  %1221 = vmatpush1.msra.mxu0 %v367
  %1222 = vmatprep.subr.mxu0 0.0
  %1223 = vmatpush2.msra.mxu0 0.0
  %1224 = vmatprep.subr.mxu0 0.0
  %1225 = vmatpush2.msra.mxu0 0.0
  %1226 = vmatprep.subr.mxu0 0.0
  %1227 = vmatpush2.msra.mxu0 0.0
  %1228 = vmatprep.subr.mxu0 0.0
  %1229 = vmatpush2.msra.mxu0 0.0
  %1230 = vmatprep.subr.mxu0 0.0
  %1231 = vmatpush2.msra.mxu0 0.0
  %1232 = vmatprep.subr.mxu0 0.0
  %1233 = vmatpush2.msra.mxu0 0.0
  %1234 = vmatprep.subr.mxu0 0.0
  %1235 = vmatpush2.msra.mxu0 0.0
  %1236 = vmatprep.subr.mxu0 0.0
  %1237 = vmatpush2.msra.mxu0 0.0
  %1238 = vmatprep.subr.mxu0 0.0
  %1239 = vmatpush2.msra.mxu0 0.0
  %1240 = vmatprep.subr.mxu0 0.0
  %1241 = vmatpush2.msra.mxu0 0.0
  %1242 = vmatprep.subr.mxu0 0.0
  %1243 = vmatpush2.msra.mxu0 0.0
  %1244 = vmatprep.subr.mxu0 0.0
  %1245 = vmatpush2.msra.mxu0 0.0
  %1246 = vmatprep.subr.mxu0 0.0
  %1247 = vmatpush2.msra.mxu0 0.0
  %1248 = vmatprep.subr.mxu0 0.0
  %1249 = vmatpush2.msra.mxu0 0.0
  %1250 = vmatprep.subr.mxu0 0.0
  %1251 = vmatpush2.msra.mxu0 0.0
  %1252 = vmatprep.subr.mxu0 0.0
  %1253 = vmatpush2.msra.mxu0 0.0
  %1254 = vmatprep.mubr.f32.mxu0 0.0
  %1255 = vmatmul.mubr.f32.gmra.mxu0 %v1118
  %v1256 = vpop.f32.mrf.mxu0
  %v1257 = vadd.f32 0.0, %v1256
  %v1258 = vpop.f32.mrf.mxu0
  %1259 = vdwg.mxu0
  %1260 = vmatprep.subr.mxu0 0.0
  %1261 = vmatpush1.msra.mxu0 0.0
  %1262 = vmatprep.subr.mxu0 0.0
  %1263 = vmatpush1.msra.mxu0 0.0
  %1264 = vmatprep.subr.mxu0 0.0
  %1265 = vmatpush1.msra.mxu0 0.0
  %1266 = vmatprep.subr.mxu0 0.0
  %1267 = vmatpush1.msra.mxu0 0.0
  %1268 = vmatprep.subr.mxu0 0.0
  %1269 = vmatpush1.msra.mxu0 0.0
  %1270 = vmatprep.subr.mxu0 0.0
  %1271 = vmatpush1.msra.mxu0 0.0
  %1272 = vmatprep.subr.mxu0 0.0
  %1273 = vmatpush1.msra.mxu0 0.0
  %1274 = vmatprep.subr.mxu0 0.0
  %1275 = vmatpush1.msra.mxu0 0.0
  %1276 = vmatprep.subr.mxu0 0.0
  %1277 = vmatpush1.msra.mxu0 %v382
  %1278 = vmatprep.subr.mxu0 0.0
  %1279 = vmatpush1.msra.mxu0 %v381
  %1280 = vmatprep.subr.mxu0 0.0
  %1281 = vmatpush1.msra.mxu0 %v380
  %1282 = vmatprep.subr.mxu0 0.0
  %1283 = vmatpush1.msra.mxu0 %v379
  %1284 = vmatprep.subr.mxu0 0.0
  %1285 = vmatpush1.msra.mxu0 %v378
  %1286 = vmatprep.subr.mxu0 0.0
  %1287 = vmatpush1.msra.mxu0 %v377
  %1288 = vmatprep.subr.mxu0 0.0
  %1289 = vmatpush1.msra.mxu0 %v376
  %1290 = vmatprep.subr.mxu0 0.0
  %1291 = vmatpush1.msra.mxu0 %v375
  %1292 = vmatprep.subr.mxu0 0.0
  %1293 = vmatpush2.msra.mxu0 0.0
  %1294 = vmatprep.subr.mxu0 0.0
  %1295 = vmatpush2.msra.mxu0 0.0
  %1296 = vmatprep.subr.mxu0 0.0
  %1297 = vmatpush2.msra.mxu0 0.0
  %1298 = vmatprep.subr.mxu0 0.0
  %1299 = vmatpush2.msra.mxu0 0.0
  %1300 = vmatprep.subr.mxu0 0.0
  %1301 = vmatpush2.msra.mxu0 0.0
  %1302 = vmatprep.subr.mxu0 0.0
  %1303 = vmatpush2.msra.mxu0 0.0
  %1304 = vmatprep.subr.mxu0 0.0
  %1305 = vmatpush2.msra.mxu0 0.0
  %1306 = vmatprep.subr.mxu0 0.0
  %1307 = vmatpush2.msra.mxu0 0.0
  %1308 = vmatprep.subr.mxu0 0.0
  %1309 = vmatpush2.msra.mxu0 0.0
  %1310 = vmatprep.subr.mxu0 0.0
  %1311 = vmatpush2.msra.mxu0 0.0
  %1312 = vmatprep.subr.mxu0 0.0
  %1313 = vmatpush2.msra.mxu0 0.0
  %1314 = vmatprep.subr.mxu0 0.0
  %1315 = vmatpush2.msra.mxu0 0.0
  %1316 = vmatprep.subr.mxu0 0.0
  %1317 = vmatpush2.msra.mxu0 0.0
  %1318 = vmatprep.subr.mxu0 0.0
  %1319 = vmatpush2.msra.mxu0 0.0
  %1320 = vmatprep.subr.mxu0 0.0
  %1321 = vmatpush2.msra.mxu0 0.0
  %1322 = vmatprep.subr.mxu0 0.0
  %1323 = vmatpush2.msra.mxu0 0.0
  %1324 = vmatprep.mubr.f32.mxu0 0.0
  %1325 = vmatmul.mubr.f32.gmra.mxu0 %v1118
  %v1326 = vpop.f32.mrf.mxu0
  %v1327 = vadd.f32 %v532, %v1326
  %v1328 = vpop.f32.mrf.mxu0
  %1329 = vdwg.mxu0
  %v1331 = vrot.slane %v1187, 2
  %v1333 = vadd.f32 %v179, %v1331
  %v1334 = vxor.u32 %v1333, 2147483648
  %v1335 = vmul.f32 %v1334, 1.442695
  %v1336 = vpow.pop %v1335
  %v1337 = vadd.f32 %v1336, 1.0
  %v1338 = vrcp.pop %v1337
  %v1339 = vmul.f32 1.0, %v1338
  %v1341 = vrot.slane %v1257, 2
  %v1343 = vadd.f32 %v265, %v1341
  %v1344 = vxor.u32 %v1343, 2147483648
  %v1345 = vmul.f32 %v1344, 1.442695
  %v1346 = vpow.pop %v1345
  %v1347 = vadd.f32 %v1346, 1.0
  %v1348 = vrcp.pop %v1347
  %v1349 = vmul.f32 1.0, %v1348
  %v1351 = vrot.slane %v1327, 2
  %v1353 = vmul.f32 %v1339, %v1351
  %v1354 = vadd.f32 %v351, %v1353
  %v1355 = vtanh.pop %v1354
  %v1356 = vsub.f32 1.0, %v1349
  %v1357 = vmul.f32 %v1356, %v1355
  %v1358 = vrot.slane %v1115, 6
  %v1360 = vmul.f32 %v1349, %v1358
  %v1361 = vadd.f32 %v1357, %v1360
  %v1363 = vrot.slane %v1361, 6
  %v1364 = vsel %vm384, %v1363, 0
  %1366 = vmatprep.subr.mxu0 0.0
  %1367 = vmatpush1.msra.mxu0 0.0
  %1368 = vmatprep.subr.mxu0 0.0
  %1369 = vmatpush1.msra.mxu0 0.0
  %1370 = vmatprep.subr.mxu0 0.0
  %1371 = vmatpush1.msra.mxu0 0.0
  %1372 = vmatprep.subr.mxu0 0.0
  %1373 = vmatpush1.msra.mxu0 0.0
  %1374 = vmatprep.subr.mxu0 0.0
  %1375 = vmatpush1.msra.mxu0 0.0
  %1376 = vmatprep.subr.mxu0 0.0
  %1377 = vmatpush1.msra.mxu0 0.0
  %1378 = vmatprep.subr.mxu0 0.0
  %1379 = vmatpush1.msra.mxu0 0.0
  %1380 = vmatprep.subr.mxu0 0.0
  %1381 = vmatpush1.msra.mxu0 0.0
  %1382 = vmatprep.subr.mxu0 0.0
  %1383 = vmatpush1.msra.mxu0 %v366
  %1384 = vmatprep.subr.mxu0 0.0
  %1385 = vmatpush1.msra.mxu0 %v365
  %1386 = vmatprep.subr.mxu0 0.0
  %1387 = vmatpush1.msra.mxu0 %v364
  %1388 = vmatprep.subr.mxu0 0.0
  %1389 = vmatpush1.msra.mxu0 %v363
  %1390 = vmatprep.subr.mxu0 0.0
  %1391 = vmatpush1.msra.mxu0 %v362
  %1392 = vmatprep.subr.mxu0 0.0
  %1393 = vmatpush1.msra.mxu0 %v361
  %1394 = vmatprep.subr.mxu0 0.0
  %1395 = vmatpush1.msra.mxu0 %v360
  %1396 = vmatprep.subr.mxu0 0.0
  %1397 = vmatpush1.msra.mxu0 %v359
  %1398 = vmatprep.subr.mxu0 0.0
  %1399 = vmatpush2.msra.mxu0 0.0
  %1400 = vmatprep.subr.mxu0 0.0
  %1401 = vmatpush2.msra.mxu0 0.0
  %1402 = vmatprep.subr.mxu0 0.0
  %1403 = vmatpush2.msra.mxu0 0.0
  %1404 = vmatprep.subr.mxu0 0.0
  %1405 = vmatpush2.msra.mxu0 0.0
  %1406 = vmatprep.subr.mxu0 0.0
  %1407 = vmatpush2.msra.mxu0 0.0
  %1408 = vmatprep.subr.mxu0 0.0
  %1409 = vmatpush2.msra.mxu0 0.0
  %1410 = vmatprep.subr.mxu0 0.0
  %1411 = vmatpush2.msra.mxu0 0.0
  %1412 = vmatprep.subr.mxu0 0.0
  %1413 = vmatpush2.msra.mxu0 0.0
  %1414 = vmatprep.subr.mxu0 0.0
  %1415 = vmatpush2.msra.mxu0 0.0
  %1416 = vmatprep.subr.mxu0 0.0
  %1417 = vmatpush2.msra.mxu0 0.0
  %1418 = vmatprep.subr.mxu0 0.0
  %1419 = vmatpush2.msra.mxu0 0.0
  %1420 = vmatprep.subr.mxu0 0.0
  %1421 = vmatpush2.msra.mxu0 0.0
  %1422 = vmatprep.subr.mxu0 0.0
  %1423 = vmatpush2.msra.mxu0 0.0
  %1424 = vmatprep.subr.mxu0 0.0
  %1425 = vmatpush2.msra.mxu0 0.0
  %1426 = vmatprep.subr.mxu0 0.0
  %1427 = vmatpush2.msra.mxu0 0.0
  %1428 = vmatprep.subr.mxu0 0.0
  %1429 = vmatpush2.msra.mxu0 0.0
  %1430 = vmatprep.mubr.f32.mxu0 0.0
  %1431 = vmatmul.mubr.f32.gmra.mxu0 %v1364
  %v1432 = vpop.f32.mrf.mxu0
  %v1433 = vadd.f32 0.0, %v1432
  %v1434 = vpop.f32.mrf.mxu0
  %1435 = vdwg.mxu0
  %1436 = vmatprep.subr.mxu0 0.0
  %1437 = vmatpush1.msra.mxu0 0.0
  %1438 = vmatprep.subr.mxu0 0.0
  %1439 = vmatpush1.msra.mxu0 0.0
  %1440 = vmatprep.subr.mxu0 0.0
  %1441 = vmatpush1.msra.mxu0 0.0
  %1442 = vmatprep.subr.mxu0 0.0
  %1443 = vmatpush1.msra.mxu0 0.0
  %1444 = vmatprep.subr.mxu0 0.0
  %1445 = vmatpush1.msra.mxu0 0.0
  %1446 = vmatprep.subr.mxu0 0.0
  %1447 = vmatpush1.msra.mxu0 0.0
  %1448 = vmatprep.subr.mxu0 0.0
  %1449 = vmatpush1.msra.mxu0 0.0
  %1450 = vmatprep.subr.mxu0 0.0
  %1451 = vmatpush1.msra.mxu0 0.0
  %1452 = vmatprep.subr.mxu0 0.0
  %1453 = vmatpush1.msra.mxu0 %v374
  %1454 = vmatprep.subr.mxu0 0.0
  %1455 = vmatpush1.msra.mxu0 %v373
  %1456 = vmatprep.subr.mxu0 0.0
  %1457 = vmatpush1.msra.mxu0 %v372
  %1458 = vmatprep.subr.mxu0 0.0
  %1459 = vmatpush1.msra.mxu0 %v371
  %1460 = vmatprep.subr.mxu0 0.0
  %1461 = vmatpush1.msra.mxu0 %v370
  %1462 = vmatprep.subr.mxu0 0.0
  %1463 = vmatpush1.msra.mxu0 %v369
  %1464 = vmatprep.subr.mxu0 0.0
  %1465 = vmatpush1.msra.mxu0 %v368
  %1466 = vmatprep.subr.mxu0 0.0
  %1467 = vmatpush1.msra.mxu0 %v367
  %1468 = vmatprep.subr.mxu0 0.0
  %1469 = vmatpush2.msra.mxu0 0.0
  %1470 = vmatprep.subr.mxu0 0.0
  %1471 = vmatpush2.msra.mxu0 0.0
  %1472 = vmatprep.subr.mxu0 0.0
  %1473 = vmatpush2.msra.mxu0 0.0
  %1474 = vmatprep.subr.mxu0 0.0
  %1475 = vmatpush2.msra.mxu0 0.0
  %1476 = vmatprep.subr.mxu0 0.0
  %1477 = vmatpush2.msra.mxu0 0.0
  %1478 = vmatprep.subr.mxu0 0.0
  %1479 = vmatpush2.msra.mxu0 0.0
  %1480 = vmatprep.subr.mxu0 0.0
  %1481 = vmatpush2.msra.mxu0 0.0
  %1482 = vmatprep.subr.mxu0 0.0
  %1483 = vmatpush2.msra.mxu0 0.0
  %1484 = vmatprep.subr.mxu0 0.0
  %1485 = vmatpush2.msra.mxu0 0.0
  %1486 = vmatprep.subr.mxu0 0.0
  %1487 = vmatpush2.msra.mxu0 0.0
  %1488 = vmatprep.subr.mxu0 0.0
  %1489 = vmatpush2.msra.mxu0 0.0
  %1490 = vmatprep.subr.mxu0 0.0
  %1491 = vmatpush2.msra.mxu0 0.0
  %1492 = vmatprep.subr.mxu0 0.0
  %1493 = vmatpush2.msra.mxu0 0.0
  %1494 = vmatprep.subr.mxu0 0.0
  %1495 = vmatpush2.msra.mxu0 0.0
  %1496 = vmatprep.subr.mxu0 0.0
  %1497 = vmatpush2.msra.mxu0 0.0
  %1498 = vmatprep.subr.mxu0 0.0
  %1499 = vmatpush2.msra.mxu0 0.0
  %1500 = vmatprep.mubr.f32.mxu0 0.0
  %1501 = vmatmul.mubr.f32.gmra.mxu0 %v1364
  %v1502 = vpop.f32.mrf.mxu0
  %v1503 = vadd.f32 0.0, %v1502
  %v1504 = vpop.f32.mrf.mxu0
  %1505 = vdwg.mxu0
  %1506 = vmatprep.subr.mxu0 0.0
  %1507 = vmatpush1.msra.mxu0 0.0
  %1508 = vmatprep.subr.mxu0 0.0
  %1509 = vmatpush1.msra.mxu0 0.0
  %1510 = vmatprep.subr.mxu0 0.0
  %1511 = vmatpush1.msra.mxu0 0.0
  %1512 = vmatprep.subr.mxu0 0.0
  %1513 = vmatpush1.msra.mxu0 0.0
  %1514 = vmatprep.subr.mxu0 0.0
  %1515 = vmatpush1.msra.mxu0 0.0
  %1516 = vmatprep.subr.mxu0 0.0
  %1517 = vmatpush1.msra.mxu0 0.0
  %1518 = vmatprep.subr.mxu0 0.0
  %1519 = vmatpush1.msra.mxu0 0.0
  %1520 = vmatprep.subr.mxu0 0.0
  %1521 = vmatpush1.msra.mxu0 0.0
  %1522 = vmatprep.subr.mxu0 0.0
  %1523 = vmatpush1.msra.mxu0 %v382
  %1524 = vmatprep.subr.mxu0 0.0
  %1525 = vmatpush1.msra.mxu0 %v381
  %1526 = vmatprep.subr.mxu0 0.0
  %1527 = vmatpush1.msra.mxu0 %v380
  %1528 = vmatprep.subr.mxu0 0.0
  %1529 = vmatpush1.msra.mxu0 %v379
  %1530 = vmatprep.subr.mxu0 0.0
  %1531 = vmatpush1.msra.mxu0 %v378
  %1532 = vmatprep.subr.mxu0 0.0
  %1533 = vmatpush1.msra.mxu0 %v377
  %1534 = vmatprep.subr.mxu0 0.0
  %1535 = vmatpush1.msra.mxu0 %v376
  %1536 = vmatprep.subr.mxu0 0.0
  %1537 = vmatpush1.msra.mxu0 %v375
  %1538 = vmatprep.subr.mxu0 0.0
  %1539 = vmatpush2.msra.mxu0 0.0
  %1540 = vmatprep.subr.mxu0 0.0
  %1541 = vmatpush2.msra.mxu0 0.0
  %1542 = vmatprep.subr.mxu0 0.0
  %1543 = vmatpush2.msra.mxu0 0.0
  %1544 = vmatprep.subr.mxu0 0.0
  %1545 = vmatpush2.msra.mxu0 0.0
  %1546 = vmatprep.subr.mxu0 0.0
  %1547 = vmatpush2.msra.mxu0 0.0
  %1548 = vmatprep.subr.mxu0 0.0
  %1549 = vmatpush2.msra.mxu0 0.0
  %1550 = vmatprep.subr.mxu0 0.0
  %1551 = vmatpush2.msra.mxu0 0.0
  %1552 = vmatprep.subr.mxu0 0.0
  %1553 = vmatpush2.msra.mxu0 0.0
  %1554 = vmatprep.subr.mxu0 0.0
  %1555 = vmatpush2.msra.mxu0 0.0
  %1556 = vmatprep.subr.mxu0 0.0
  %1557 = vmatpush2.msra.mxu0 0.0
  %1558 = vmatprep.subr.mxu0 0.0
  %1559 = vmatpush2.msra.mxu0 0.0
  %1560 = vmatprep.subr.mxu0 0.0
  %1561 = vmatpush2.msra.mxu0 0.0
  %1562 = vmatprep.subr.mxu0 0.0
  %1563 = vmatpush2.msra.mxu0 0.0
  %1564 = vmatprep.subr.mxu0 0.0
  %1565 = vmatpush2.msra.mxu0 0.0
  %1566 = vmatprep.subr.mxu0 0.0
  %1567 = vmatpush2.msra.mxu0 0.0
  %1568 = vmatprep.subr.mxu0 0.0
  %1569 = vmatpush2.msra.mxu0 0.0
  %1570 = vmatprep.mubr.f32.mxu0 0.0
  %1571 = vmatmul.mubr.f32.gmra.mxu0 %v1364
  %v1572 = vpop.f32.mrf.mxu0
  %v1573 = vadd.f32 %v532, %v1572
  %v1574 = vpop.f32.mrf.mxu0
  %1575 = vdwg.mxu0
  %v1576 = vadd.f32 %v184, %v1433
  %v1577 = vxor.u32 %v1576, 2147483648
  %v1578 = vmul.f32 %v1577, 1.442695
  %v1579 = vpow.pop %v1578
  %v1580 = vadd.f32 %v1579, 1.0
  %v1581 = vrcp.pop %v1580
  %v1582 = vmul.f32 1.0, %v1581
  %v1583 = vadd.f32 %v270, %v1503
  %v1584 = vxor.u32 %v1583, 2147483648
  %v1585 = vmul.f32 %v1584, 1.442695
  %v1586 = vpow.pop %v1585
  %v1587 = vadd.f32 %v1586, 1.0
  %v1588 = vrcp.pop %v1587
  %v1589 = vmul.f32 1.0, %v1588
  %v1590 = vmul.f32 %v1582, %v1573
  %v1591 = vadd.f32 %v356, %v1590
  %v1592 = vtanh.pop %v1591
  %v1593 = vsub.f32 1.0, %v1589
  %v1594 = vmul.f32 %v1593, %v1592
  %v1596 = vmul.f32 %v1589, %v1363
  %v1597 = vadd.f32 %v1594, %v1596
  %v1599 = vsel %vm384, %v1597, 0
  %1601 = vmatprep.subr.mxu0 0.0
  %1602 = vmatpush1.msra.mxu0 0.0
  %1603 = vmatprep.subr.mxu0 0.0
  %1604 = vmatpush1.msra.mxu0 0.0
  %1605 = vmatprep.subr.mxu0 0.0
  %1606 = vmatpush1.msra.mxu0 0.0
  %1607 = vmatprep.subr.mxu0 0.0
  %1608 = vmatpush1.msra.mxu0 0.0
  %1609 = vmatprep.subr.mxu0 0.0
  %1610 = vmatpush1.msra.mxu0 0.0
  %1611 = vmatprep.subr.mxu0 0.0
  %1612 = vmatpush1.msra.mxu0 0.0
  %1613 = vmatprep.subr.mxu0 0.0
  %1614 = vmatpush1.msra.mxu0 0.0
  %1615 = vmatprep.subr.mxu0 0.0
  %1616 = vmatpush1.msra.mxu0 0.0
  %1617 = vmatprep.subr.mxu0 0.0
  %1618 = vmatpush1.msra.mxu0 %v366
  %1619 = vmatprep.subr.mxu0 0.0
  %1620 = vmatpush1.msra.mxu0 %v365
  %1621 = vmatprep.subr.mxu0 0.0
  %1622 = vmatpush1.msra.mxu0 %v364
  %1623 = vmatprep.subr.mxu0 0.0
  %1624 = vmatpush1.msra.mxu0 %v363
  %1625 = vmatprep.subr.mxu0 0.0
  %1626 = vmatpush1.msra.mxu0 %v362
  %1627 = vmatprep.subr.mxu0 0.0
  %1628 = vmatpush1.msra.mxu0 %v361
  %1629 = vmatprep.subr.mxu0 0.0
  %1630 = vmatpush1.msra.mxu0 %v360
  %1631 = vmatprep.subr.mxu0 0.0
  %1632 = vmatpush1.msra.mxu0 %v359
  %1633 = vmatprep.subr.mxu0 0.0
  %1634 = vmatpush2.msra.mxu0 0.0
  %1635 = vmatprep.subr.mxu0 0.0
  %1636 = vmatpush2.msra.mxu0 0.0
  %1637 = vmatprep.subr.mxu0 0.0
  %1638 = vmatpush2.msra.mxu0 0.0
  %1639 = vmatprep.subr.mxu0 0.0
  %1640 = vmatpush2.msra.mxu0 0.0
  %1641 = vmatprep.subr.mxu0 0.0
  %1642 = vmatpush2.msra.mxu0 0.0
  %1643 = vmatprep.subr.mxu0 0.0
  %1644 = vmatpush2.msra.mxu0 0.0
  %1645 = vmatprep.subr.mxu0 0.0
  %1646 = vmatpush2.msra.mxu0 0.0
  %1647 = vmatprep.subr.mxu0 0.0
  %1648 = vmatpush2.msra.mxu0 0.0
  %1649 = vmatprep.subr.mxu0 0.0
  %1650 = vmatpush2.msra.mxu0 0.0
  %1651 = vmatprep.subr.mxu0 0.0
  %1652 = vmatpush2.msra.mxu0 0.0
  %1653 = vmatprep.subr.mxu0 0.0
  %1654 = vmatpush2.msra.mxu0 0.0
  %1655 = vmatprep.subr.mxu0 0.0
  %1656 = vmatpush2.msra.mxu0 0.0
  %1657 = vmatprep.subr.mxu0 0.0
  %1658 = vmatpush2.msra.mxu0 0.0
  %1659 = vmatprep.subr.mxu0 0.0
  %1660 = vmatpush2.msra.mxu0 0.0
  %1661 = vmatprep.subr.mxu0 0.0
  %1662 = vmatpush2.msra.mxu0 0.0
  %1663 = vmatprep.subr.mxu0 0.0
  %1664 = vmatpush2.msra.mxu0 0.0
  %1665 = vmatprep.mubr.f32.mxu0 0.0
  %1666 = vmatmul.mubr.f32.gmra.mxu0 %v1599
  %v1667 = vpop.f32.mrf.mxu0
  %v1668 = vadd.f32 0.0, %v1667
  %v1669 = vpop.f32.mrf.mxu0
  %1670 = vdwg.mxu0
  %1671 = vmatprep.subr.mxu0 0.0
  %1672 = vmatpush1.msra.mxu0 0.0
  %1673 = vmatprep.subr.mxu0 0.0
  %1674 = vmatpush1.msra.mxu0 0.0
  %1675 = vmatprep.subr.mxu0 0.0
  %1676 = vmatpush1.msra.mxu0 0.0
  %1677 = vmatprep.subr.mxu0 0.0
  %1678 = vmatpush1.msra.mxu0 0.0
  %1679 = vmatprep.subr.mxu0 0.0
  %1680 = vmatpush1.msra.mxu0 0.0
  %1681 = vmatprep.subr.mxu0 0.0
  %1682 = vmatpush1.msra.mxu0 0.0
  %1683 = vmatprep.subr.mxu0 0.0
  %1684 = vmatpush1.msra.mxu0 0.0
  %1685 = vmatprep.subr.mxu0 0.0
  %1686 = vmatpush1.msra.mxu0 0.0
  %1687 = vmatprep.subr.mxu0 0.0
  %1688 = vmatpush1.msra.mxu0 %v374
  %1689 = vmatprep.subr.mxu0 0.0
  %1690 = vmatpush1.msra.mxu0 %v373
  %1691 = vmatprep.subr.mxu0 0.0
  %1692 = vmatpush1.msra.mxu0 %v372
  %1693 = vmatprep.subr.mxu0 0.0
  %1694 = vmatpush1.msra.mxu0 %v371
  %1695 = vmatprep.subr.mxu0 0.0
  %1696 = vmatpush1.msra.mxu0 %v370
  %1697 = vmatprep.subr.mxu0 0.0
  %1698 = vmatpush1.msra.mxu0 %v369
  %1699 = vmatprep.subr.mxu0 0.0
  %1700 = vmatpush1.msra.mxu0 %v368
  %1701 = vmatprep.subr.mxu0 0.0
  %1702 = vmatpush1.msra.mxu0 %v367
  %1703 = vmatprep.subr.mxu0 0.0
  %1704 = vmatpush2.msra.mxu0 0.0
  %1705 = vmatprep.subr.mxu0 0.0
  %1706 = vmatpush2.msra.mxu0 0.0
  %1707 = vmatprep.subr.mxu0 0.0
  %1708 = vmatpush2.msra.mxu0 0.0
  %1709 = vmatprep.subr.mxu0 0.0
  %1710 = vmatpush2.msra.mxu0 0.0
  %1711 = vmatprep.subr.mxu0 0.0
  %1712 = vmatpush2.msra.mxu0 0.0
  %1713 = vmatprep.subr.mxu0 0.0
  %1714 = vmatpush2.msra.mxu0 0.0
  %1715 = vmatprep.subr.mxu0 0.0
  %1716 = vmatpush2.msra.mxu0 0.0
  %1717 = vmatprep.subr.mxu0 0.0
  %1718 = vmatpush2.msra.mxu0 0.0
  %1719 = vmatprep.subr.mxu0 0.0
  %1720 = vmatpush2.msra.mxu0 0.0
  %1721 = vmatprep.subr.mxu0 0.0
  %1722 = vmatpush2.msra.mxu0 0.0
  %1723 = vmatprep.subr.mxu0 0.0
  %1724 = vmatpush2.msra.mxu0 0.0
  %1725 = vmatprep.subr.mxu0 0.0
  %1726 = vmatpush2.msra.mxu0 0.0
  %1727 = vmatprep.subr.mxu0 0.0
  %1728 = vmatpush2.msra.mxu0 0.0
  %1729 = vmatprep.subr.mxu0 0.0
  %1730 = vmatpush2.msra.mxu0 0.0
  %1731 = vmatprep.subr.mxu0 0.0
  %1732 = vmatpush2.msra.mxu0 0.0
  %1733 = vmatprep.subr.mxu0 0.0
  %1734 = vmatpush2.msra.mxu0 0.0
  %1735 = vmatprep.mubr.f32.mxu0 0.0
  %1736 = vmatmul.mubr.f32.gmra.mxu0 %v1599
  %v1737 = vpop.f32.mrf.mxu0
  %v1738 = vadd.f32 0.0, %v1737
  %v1739 = vpop.f32.mrf.mxu0
  %1740 = vdwg.mxu0
  %1741 = vmatprep.subr.mxu0 0.0
  %1742 = vmatpush1.msra.mxu0 0.0
  %1743 = vmatprep.subr.mxu0 0.0
  %1744 = vmatpush1.msra.mxu0 0.0
  %1745 = vmatprep.subr.mxu0 0.0
  %1746 = vmatpush1.msra.mxu0 0.0
  %1747 = vmatprep.subr.mxu0 0.0
  %1748 = vmatpush1.msra.mxu0 0.0
  %1749 = vmatprep.subr.mxu0 0.0
  %1750 = vmatpush1.msra.mxu0 0.0
  %1751 = vmatprep.subr.mxu0 0.0
  %1752 = vmatpush1.msra.mxu0 0.0
  %1753 = vmatprep.subr.mxu0 0.0
  %1754 = vmatpush1.msra.mxu0 0.0
  %1755 = vmatprep.subr.mxu0 0.0
  %1756 = vmatpush1.msra.mxu0 0.0
  %1757 = vmatprep.subr.mxu0 0.0
  %1758 = vmatpush1.msra.mxu0 %v382
  %1759 = vmatprep.subr.mxu0 0.0
  %1760 = vmatpush1.msra.mxu0 %v381
  %1761 = vmatprep.subr.mxu0 0.0
  %1762 = vmatpush1.msra.mxu0 %v380
  %1763 = vmatprep.subr.mxu0 0.0
  %1764 = vmatpush1.msra.mxu0 %v379
  %1765 = vmatprep.subr.mxu0 0.0
  %1766 = vmatpush1.msra.mxu0 %v378
  %1767 = vmatprep.subr.mxu0 0.0
  %1768 = vmatpush1.msra.mxu0 %v377
  %1769 = vmatprep.subr.mxu0 0.0
  %1770 = vmatpush1.msra.mxu0 %v376
  %1771 = vmatprep.subr.mxu0 0.0
  %1772 = vmatpush1.msra.mxu0 %v375
  %1773 = vmatprep.subr.mxu0 0.0
  %1774 = vmatpush2.msra.mxu0 0.0
  %1775 = vmatprep.subr.mxu0 0.0
  %1776 = vmatpush2.msra.mxu0 0.0
  %1777 = vmatprep.subr.mxu0 0.0
  %1778 = vmatpush2.msra.mxu0 0.0
  %1779 = vmatprep.subr.mxu0 0.0
  %1780 = vmatpush2.msra.mxu0 0.0
  %1781 = vmatprep.subr.mxu0 0.0
  %1782 = vmatpush2.msra.mxu0 0.0
  %1783 = vmatprep.subr.mxu0 0.0
  %1784 = vmatpush2.msra.mxu0 0.0
  %1785 = vmatprep.subr.mxu0 0.0
  %1786 = vmatpush2.msra.mxu0 0.0
  %1787 = vmatprep.subr.mxu0 0.0
  %1788 = vmatpush2.msra.mxu0 0.0
  %1789 = vmatprep.subr.mxu0 0.0
  %1790 = vmatpush2.msra.mxu0 0.0
  %1791 = vmatprep.subr.mxu0 0.0
  %1792 = vmatpush2.msra.mxu0 0.0
  %1793 = vmatprep.subr.mxu0 0.0
  %1794 = vmatpush2.msra.mxu0 0.0
  %1795 = vmatprep.subr.mxu0 0.0
  %1796 = vmatpush2.msra.mxu0 0.0
  %1797 = vmatprep.subr.mxu0 0.0
  %1798 = vmatpush2.msra.mxu0 0.0
  %1799 = vmatprep.subr.mxu0 0.0
  %1800 = vmatpush2.msra.mxu0 0.0
  %1801 = vmatprep.subr.mxu0 0.0
  %1802 = vmatpush2.msra.mxu0 0.0
  %1803 = vmatprep.subr.mxu0 0.0
  %1804 = vmatpush2.msra.mxu0 0.0
  %1805 = vmatprep.mubr.f32.mxu0 0.0
  %1806 = vmatmul.mubr.f32.gmra.mxu0 %v1599
  %v1807 = vpop.f32.mrf.mxu0
  %v1808 = vadd.f32 %v532, %v1807
  %v1809 = vpop.f32.mrf.mxu0
  %1810 = vdwg.mxu0
  %v1812 = vrot.slane %v1668, 6
  %v1814 = vadd.f32 %v184, %v1812
  %v1815 = vxor.u32 %v1814, 2147483648
  %v1816 = vmul.f32 %v1815, 1.442695
  %v1817 = vpow.pop %v1816
  %v1818 = vadd.f32 %v1817, 1.0
  %v1819 = vrcp.pop %v1818
  %v1820 = vmul.f32 1.0, %v1819
  %v1822 = vrot.slane %v1738, 6
  %v1824 = vadd.f32 %v270, %v1822
  %v1825 = vxor.u32 %v1824, 2147483648
  %v1826 = vmul.f32 %v1825, 1.442695
  %v1827 = vpow.pop %v1826
  %v1828 = vadd.f32 %v1827, 1.0
  %v1829 = vrcp.pop %v1828
  %v1830 = vmul.f32 1.0, %v1829
  %v1832 = vrot.slane %v1808, 6
  %v1834 = vmul.f32 %v1820, %v1832
  %v1835 = vadd.f32 %v356, %v1834
  %v1836 = vtanh.pop %v1835
  %v1837 = vsub.f32 1.0, %v1830
  %v1838 = vmul.f32 %v1837, %v1836
  %v1839 = vrot.slane %v1597, 6
  %v1841 = vmul.f32 %v1830, %v1839
  %v1842 = vadd.f32 %v1838, %v1841
  %v1844 = vrot.slane %v1842, 2
  %v1845 = vsel %vm384, %v1844, 0
  %1847 = vmatprep.subr.mxu0 0.0
  %1848 = vmatpush1.msra.mxu0 0.0
  %1849 = vmatprep.subr.mxu0 0.0
  %1850 = vmatpush1.msra.mxu0 0.0
  %1851 = vmatprep.subr.mxu0 0.0
  %1852 = vmatpush1.msra.mxu0 0.0
  %1853 = vmatprep.subr.mxu0 0.0
  %1854 = vmatpush1.msra.mxu0 0.0
  %1855 = vmatprep.subr.mxu0 0.0
  %1856 = vmatpush1.msra.mxu0 0.0
  %1857 = vmatprep.subr.mxu0 0.0
  %1858 = vmatpush1.msra.mxu0 0.0
  %1859 = vmatprep.subr.mxu0 0.0
  %1860 = vmatpush1.msra.mxu0 0.0
  %1861 = vmatprep.subr.mxu0 0.0
  %1862 = vmatpush1.msra.mxu0 0.0
  %1863 = vmatprep.subr.mxu0 0.0
  %1864 = vmatpush1.msra.mxu0 %v366
  %1865 = vmatprep.subr.mxu0 0.0
  %1866 = vmatpush1.msra.mxu0 %v365
  %1867 = vmatprep.subr.mxu0 0.0
  %1868 = vmatpush1.msra.mxu0 %v364
  %1869 = vmatprep.subr.mxu0 0.0
  %1870 = vmatpush1.msra.mxu0 %v363
  %1871 = vmatprep.subr.mxu0 0.0
  %1872 = vmatpush1.msra.mxu0 %v362
  %1873 = vmatprep.subr.mxu0 0.0
  %1874 = vmatpush1.msra.mxu0 %v361
  %1875 = vmatprep.subr.mxu0 0.0
  %1876 = vmatpush1.msra.mxu0 %v360
  %1877 = vmatprep.subr.mxu0 0.0
  %1878 = vmatpush1.msra.mxu0 %v359
  %1879 = vmatprep.subr.mxu0 0.0
  %1880 = vmatpush2.msra.mxu0 0.0
  %1881 = vmatprep.subr.mxu0 0.0
  %1882 = vmatpush2.msra.mxu0 0.0
  %1883 = vmatprep.subr.mxu0 0.0
  %1884 = vmatpush2.msra.mxu0 0.0
  %1885 = vmatprep.subr.mxu0 0.0
  %1886 = vmatpush2.msra.mxu0 0.0
  %1887 = vmatprep.subr.mxu0 0.0
  %1888 = vmatpush2.msra.mxu0 0.0
  %1889 = vmatprep.subr.mxu0 0.0
  %1890 = vmatpush2.msra.mxu0 0.0
  %1891 = vmatprep.subr.mxu0 0.0
  %1892 = vmatpush2.msra.mxu0 0.0
  %1893 = vmatprep.subr.mxu0 0.0
  %1894 = vmatpush2.msra.mxu0 0.0
  %1895 = vmatprep.subr.mxu0 0.0
  %1896 = vmatpush2.msra.mxu0 0.0
  %1897 = vmatprep.subr.mxu0 0.0
  %1898 = vmatpush2.msra.mxu0 0.0
  %1899 = vmatprep.subr.mxu0 0.0
  %1900 = vmatpush2.msra.mxu0 0.0
  %1901 = vmatprep.subr.mxu0 0.0
  %1902 = vmatpush2.msra.mxu0 0.0
  %1903 = vmatprep.subr.mxu0 0.0
  %1904 = vmatpush2.msra.mxu0 0.0
  %1905 = vmatprep.subr.mxu0 0.0
  %1906 = vmatpush2.msra.mxu0 0.0
  %1907 = vmatprep.subr.mxu0 0.0
  %1908 = vmatpush2.msra.mxu0 0.0
  %1909 = vmatprep.subr.mxu0 0.0
  %1910 = vmatpush2.msra.mxu0 0.0
  %1911 = vmatprep.mubr.f32.mxu0 0.0
  %1912 = vmatmul.mubr.f32.gmra.mxu0 %v1845
  %v1913 = vpop.f32.mrf.mxu0
  %v1914 = vadd.f32 0.0, %v1913
  %v1915 = vpop.f32.mrf.mxu0
  %1916 = vdwg.mxu0
  %1917 = vmatprep.subr.mxu0 0.0
  %1918 = vmatpush1.msra.mxu0 0.0
  %1919 = vmatprep.subr.mxu0 0.0
  %1920 = vmatpush1.msra.mxu0 0.0
  %1921 = vmatprep.subr.mxu0 0.0
  %1922 = vmatpush1.msra.mxu0 0.0
  %1923 = vmatprep.subr.mxu0 0.0
  %1924 = vmatpush1.msra.mxu0 0.0
  %1925 = vmatprep.subr.mxu0 0.0
  %1926 = vmatpush1.msra.mxu0 0.0
  %1927 = vmatprep.subr.mxu0 0.0
  %1928 = vmatpush1.msra.mxu0 0.0
  %1929 = vmatprep.subr.mxu0 0.0
  %1930 = vmatpush1.msra.mxu0 0.0
  %1931 = vmatprep.subr.mxu0 0.0
  %1932 = vmatpush1.msra.mxu0 0.0
  %1933 = vmatprep.subr.mxu0 0.0
  %1934 = vmatpush1.msra.mxu0 %v374
  %1935 = vmatprep.subr.mxu0 0.0
  %1936 = vmatpush1.msra.mxu0 %v373
  %1937 = vmatprep.subr.mxu0 0.0
  %1938 = vmatpush1.msra.mxu0 %v372
  %1939 = vmatprep.subr.mxu0 0.0
  %1940 = vmatpush1.msra.mxu0 %v371
  %1941 = vmatprep.subr.mxu0 0.0
  %1942 = vmatpush1.msra.mxu0 %v370
  %1943 = vmatprep.subr.mxu0 0.0
  %1944 = vmatpush1.msra.mxu0 %v369
  %1945 = vmatprep.subr.mxu0 0.0
  %1946 = vmatpush1.msra.mxu0 %v368
  %1947 = vmatprep.subr.mxu0 0.0
  %1948 = vmatpush1.msra.mxu0 %v367
  %1949 = vmatprep.subr.mxu0 0.0
  %1950 = vmatpush2.msra.mxu0 0.0
  %1951 = vmatprep.subr.mxu0 0.0
  %1952 = vmatpush2.msra.mxu0 0.0
  %1953 = vmatprep.subr.mxu0 0.0
  %1954 = vmatpush2.msra.mxu0 0.0
  %1955 = vmatprep.subr.mxu0 0.0
  %1956 = vmatpush2.msra.mxu0 0.0
  %1957 = vmatprep.subr.mxu0 0.0
  %1958 = vmatpush2.msra.mxu0 0.0
  %1959 = vmatprep.subr.mxu0 0.0
  %1960 = vmatpush2.msra.mxu0 0.0
  %1961 = vmatprep.subr.mxu0 0.0
  %1962 = vmatpush2.msra.mxu0 0.0
  %1963 = vmatprep.subr.mxu0 0.0
  %1964 = vmatpush2.msra.mxu0 0.0
  %1965 = vmatprep.subr.mxu0 0.0
  %1966 = vmatpush2.msra.mxu0 0.0
  %1967 = vmatprep.subr.mxu0 0.0
  %1968 = vmatpush2.msra.mxu0 0.0
  %1969 = vmatprep.subr.mxu0 0.0
  %1970 = vmatpush2.msra.mxu0 0.0
  %1971 = vmatprep.subr.mxu0 0.0
  %1972 = vmatpush2.msra.mxu0 0.0
  %1973 = vmatprep.subr.mxu0 0.0
  %1974 = vmatpush2.msra.mxu0 0.0
  %1975 = vmatprep.subr.mxu0 0.0
  %1976 = vmatpush2.msra.mxu0 0.0
  %1977 = vmatprep.subr.mxu0 0.0
  %1978 = vmatpush2.msra.mxu0 0.0
  %1979 = vmatprep.subr.mxu0 0.0
  %1980 = vmatpush2.msra.mxu0 0.0
  %1981 = vmatprep.mubr.f32.mxu0 0.0
  %1982 = vmatmul.mubr.f32.gmra.mxu0 %v1845
  %v1983 = vpop.f32.mrf.mxu0
  %v1984 = vadd.f32 0.0, %v1983
  %v1985 = vpop.f32.mrf.mxu0
  %1986 = vdwg.mxu0
  %1987 = vmatprep.subr.mxu0 0.0
  %1988 = vmatpush1.msra.mxu0 0.0
  %1989 = vmatprep.subr.mxu0 0.0
  %1990 = vmatpush1.msra.mxu0 0.0
  %1991 = vmatprep.subr.mxu0 0.0
  %1992 = vmatpush1.msra.mxu0 0.0
  %1993 = vmatprep.subr.mxu0 0.0
  %1994 = vmatpush1.msra.mxu0 0.0
  %1995 = vmatprep.subr.mxu0 0.0
  %1996 = vmatpush1.msra.mxu0 0.0
  %1997 = vmatprep.subr.mxu0 0.0
  %1998 = vmatpush1.msra.mxu0 0.0
  %1999 = vmatprep.subr.mxu0 0.0
  %2000 = vmatpush1.msra.mxu0 0.0
  %2001 = vmatprep.subr.mxu0 0.0
  %2002 = vmatpush1.msra.mxu0 0.0
  %2003 = vmatprep.subr.mxu0 0.0
  %2004 = vmatpush1.msra.mxu0 %v382
  %2005 = vmatprep.subr.mxu0 0.0
  %2006 = vmatpush1.msra.mxu0 %v381
  %2007 = vmatprep.subr.mxu0 0.0
  %2008 = vmatpush1.msra.mxu0 %v380
  %2009 = vmatprep.subr.mxu0 0.0
  %2010 = vmatpush1.msra.mxu0 %v379
  %2011 = vmatprep.subr.mxu0 0.0
  %2012 = vmatpush1.msra.mxu0 %v378
  %2013 = vmatprep.subr.mxu0 0.0
  %2014 = vmatpush1.msra.mxu0 %v377
  %2015 = vmatprep.subr.mxu0 0.0
  %2016 = vmatpush1.msra.mxu0 %v376
  %2017 = vmatprep.subr.mxu0 0.0
  %2018 = vmatpush1.msra.mxu0 %v375
  %2019 = vmatprep.subr.mxu0 0.0
  %2020 = vmatpush2.msra.mxu0 0.0
  %2021 = vmatprep.subr.mxu0 0.0
  %2022 = vmatpush2.msra.mxu0 0.0
  %2023 = vmatprep.subr.mxu0 0.0
  %2024 = vmatpush2.msra.mxu0 0.0
  %2025 = vmatprep.subr.mxu0 0.0
  %2026 = vmatpush2.msra.mxu0 0.0
  %2027 = vmatprep.subr.mxu0 0.0
  %2028 = vmatpush2.msra.mxu0 0.0
  %2029 = vmatprep.subr.mxu0 0.0
  %2030 = vmatpush2.msra.mxu0 0.0
  %2031 = vmatprep.subr.mxu0 0.0
  %2032 = vmatpush2.msra.mxu0 0.0
  %2033 = vmatprep.subr.mxu0 0.0
  %2034 = vmatpush2.msra.mxu0 0.0
  %2035 = vmatprep.subr.mxu0 0.0
  %2036 = vmatpush2.msra.mxu0 0.0
  %2037 = vmatprep.subr.mxu0 0.0
  %2038 = vmatpush2.msra.mxu0 0.0
  %2039 = vmatprep.subr.mxu0 0.0
  %2040 = vmatpush2.msra.mxu0 0.0
  %2041 = vmatprep.subr.mxu0 0.0
  %2042 = vmatpush2.msra.mxu0 0.0
  %2043 = vmatprep.subr.mxu0 0.0
  %2044 = vmatpush2.msra.mxu0 0.0
  %2045 = vmatprep.subr.mxu0 0.0
  %2046 = vmatpush2.msra.mxu0 0.0
  %2047 = vmatprep.subr.mxu0 0.0
  %2048 = vmatpush2.msra.mxu0 0.0
  %2049 = vmatprep.subr.mxu0 0.0
  %2050 = vmatpush2.msra.mxu0 0.0
  %2051 = vmatprep.mubr.f32.mxu0 0.0
  %2052 = vmatmul.mubr.f32.gmra.mxu0 %v1845
  %v2053 = vpop.f32.mrf.mxu0
  %v2054 = vadd.f32 %v532, %v2053
  %v2055 = vpop.f32.mrf.mxu0
  %2056 = vdwg.mxu0
  %v2058 = vrot.slane %v1914, 4
  %v2060 = vadd.f32 %v184, %v2058
  %v2061 = vxor.u32 %v2060, 2147483648
  %v2062 = vmul.f32 %v2061, 1.442695
  %v2063 = vpow.pop %v2062
  %v2064 = vadd.f32 %v2063, 1.0
  %v2065 = vrcp.pop %v2064
  %v2066 = vmul.f32 1.0, %v2065
  %v2068 = vrot.slane %v1984, 4
  %v2070 = vadd.f32 %v270, %v2068
  %v2071 = vxor.u32 %v2070, 2147483648
  %v2072 = vmul.f32 %v2071, 1.442695
  %v2073 = vpow.pop %v2072
  %v2074 = vadd.f32 %v2073, 1.0
  %v2075 = vrcp.pop %v2074
  %v2076 = vmul.f32 1.0, %v2075
  %v2078 = vrot.slane %v2054, 4
  %v2080 = vmul.f32 %v2066, %v2078
  %v2081 = vadd.f32 %v356, %v2080
  %v2082 = vtanh.pop %v2081
  %v2083 = vsub.f32 1.0, %v2076
  %v2084 = vmul.f32 %v2083, %v2082
  %v2085 = vrot.slane %v1842, 6
  %v2087 = vmul.f32 %v2076, %v2085
  %v2088 = vadd.f32 %v2084, %v2087
  %v2090 = vrot.slane %v2088, 4
  %v2091 = vsel %vm384, %v2090, 0
  %2093 = vmatprep.subr.mxu0 0.0
  %2094 = vmatpush1.msra.mxu0 0.0
  %2095 = vmatprep.subr.mxu0 0.0
  %2096 = vmatpush1.msra.mxu0 0.0
  %2097 = vmatprep.subr.mxu0 0.0
  %2098 = vmatpush1.msra.mxu0 0.0
  %2099 = vmatprep.subr.mxu0 0.0
  %2100 = vmatpush1.msra.mxu0 0.0
  %2101 = vmatprep.subr.mxu0 0.0
  %2102 = vmatpush1.msra.mxu0 0.0
  %2103 = vmatprep.subr.mxu0 0.0
  %2104 = vmatpush1.msra.mxu0 0.0
  %2105 = vmatprep.subr.mxu0 0.0
  %2106 = vmatpush1.msra.mxu0 0.0
  %2107 = vmatprep.subr.mxu0 0.0
  %2108 = vmatpush1.msra.mxu0 0.0
  %2109 = vmatprep.subr.mxu0 0.0
  %2110 = vmatpush1.msra.mxu0 %v366
  %2111 = vmatprep.subr.mxu0 0.0
  %2112 = vmatpush1.msra.mxu0 %v365
  %2113 = vmatprep.subr.mxu0 0.0
  %2114 = vmatpush1.msra.mxu0 %v364
  %2115 = vmatprep.subr.mxu0 0.0
  %2116 = vmatpush1.msra.mxu0 %v363
  %2117 = vmatprep.subr.mxu0 0.0
  %2118 = vmatpush1.msra.mxu0 %v362
  %2119 = vmatprep.subr.mxu0 0.0
  %2120 = vmatpush1.msra.mxu0 %v361
  %2121 = vmatprep.subr.mxu0 0.0
  %2122 = vmatpush1.msra.mxu0 %v360
  %2123 = vmatprep.subr.mxu0 0.0
  %2124 = vmatpush1.msra.mxu0 %v359
  %2125 = vmatprep.subr.mxu0 0.0
  %2126 = vmatpush2.msra.mxu0 0.0
  %2127 = vmatprep.subr.mxu0 0.0
  %2128 = vmatpush2.msra.mxu0 0.0
  %2129 = vmatprep.subr.mxu0 0.0
  %2130 = vmatpush2.msra.mxu0 0.0
  %2131 = vmatprep.subr.mxu0 0.0
  %2132 = vmatpush2.msra.mxu0 0.0
  %2133 = vmatprep.subr.mxu0 0.0
  %2134 = vmatpush2.msra.mxu0 0.0
  %2135 = vmatprep.subr.mxu0 0.0
  %2136 = vmatpush2.msra.mxu0 0.0
  %2137 = vmatprep.subr.mxu0 0.0
  %2138 = vmatpush2.msra.mxu0 0.0
  %2139 = vmatprep.subr.mxu0 0.0
  %2140 = vmatpush2.msra.mxu0 0.0
  %2141 = vmatprep.subr.mxu0 0.0
  %2142 = vmatpush2.msra.mxu0 0.0
  %2143 = vmatprep.subr.mxu0 0.0
  %2144 = vmatpush2.msra.mxu0 0.0
  %2145 = vmatprep.subr.mxu0 0.0
  %2146 = vmatpush2.msra.mxu0 0.0
  %2147 = vmatprep.subr.mxu0 0.0
  %2148 = vmatpush2.msra.mxu0 0.0
  %2149 = vmatprep.subr.mxu0 0.0
  %2150 = vmatpush2.msra.mxu0 0.0
  %2151 = vmatprep.subr.mxu0 0.0
  %2152 = vmatpush2.msra.mxu0 0.0
  %2153 = vmatprep.subr.mxu0 0.0
  %2154 = vmatpush2.msra.mxu0 0.0
  %2155 = vmatprep.subr.mxu0 0.0
  %2156 = vmatpush2.msra.mxu0 0.0
  %2157 = vmatprep.mubr.f32.mxu0 0.0
  %2158 = vmatmul.mubr.f32.gmra.mxu0 %v2091
  %v2159 = vpop.f32.mrf.mxu0
  %v2160 = vadd.f32 0.0, %v2159
  %v2161 = vpop.f32.mrf.mxu0
  %2162 = vdwg.mxu0
  %2163 = vmatprep.subr.mxu0 0.0
  %2164 = vmatpush1.msra.mxu0 0.0
  %2165 = vmatprep.subr.mxu0 0.0
  %2166 = vmatpush1.msra.mxu0 0.0
  %2167 = vmatprep.subr.mxu0 0.0
  %2168 = vmatpush1.msra.mxu0 0.0
  %2169 = vmatprep.subr.mxu0 0.0
  %2170 = vmatpush1.msra.mxu0 0.0
  %2171 = vmatprep.subr.mxu0 0.0
  %2172 = vmatpush1.msra.mxu0 0.0
  %2173 = vmatprep.subr.mxu0 0.0
  %2174 = vmatpush1.msra.mxu0 0.0
  %2175 = vmatprep.subr.mxu0 0.0
  %2176 = vmatpush1.msra.mxu0 0.0
  %2177 = vmatprep.subr.mxu0 0.0
  %2178 = vmatpush1.msra.mxu0 0.0
  %2179 = vmatprep.subr.mxu0 0.0
  %2180 = vmatpush1.msra.mxu0 %v374
  %2181 = vmatprep.subr.mxu0 0.0
  %2182 = vmatpush1.msra.mxu0 %v373
  %2183 = vmatprep.subr.mxu0 0.0
  %2184 = vmatpush1.msra.mxu0 %v372
  %2185 = vmatprep.subr.mxu0 0.0
  %2186 = vmatpush1.msra.mxu0 %v371
  %2187 = vmatprep.subr.mxu0 0.0
  %2188 = vmatpush1.msra.mxu0 %v370
  %2189 = vmatprep.subr.mxu0 0.0
  %2190 = vmatpush1.msra.mxu0 %v369
  %2191 = vmatprep.subr.mxu0 0.0
  %2192 = vmatpush1.msra.mxu0 %v368
  %2193 = vmatprep.subr.mxu0 0.0
  %2194 = vmatpush1.msra.mxu0 %v367
  %2195 = vmatprep.subr.mxu0 0.0
  %2196 = vmatpush2.msra.mxu0 0.0
  %2197 = vmatprep.subr.mxu0 0.0
  %2198 = vmatpush2.msra.mxu0 0.0
  %2199 = vmatprep.subr.mxu0 0.0
  %2200 = vmatpush2.msra.mxu0 0.0
  %2201 = vmatprep.subr.mxu0 0.0
  %2202 = vmatpush2.msra.mxu0 0.0
  %2203 = vmatprep.subr.mxu0 0.0
  %2204 = vmatpush2.msra.mxu0 0.0
  %2205 = vmatprep.subr.mxu0 0.0
  %2206 = vmatpush2.msra.mxu0 0.0
  %2207 = vmatprep.subr.mxu0 0.0
  %2208 = vmatpush2.msra.mxu0 0.0
  %2209 = vmatprep.subr.mxu0 0.0
  %2210 = vmatpush2.msra.mxu0 0.0
  %2211 = vmatprep.subr.mxu0 0.0
  %2212 = vmatpush2.msra.mxu0 0.0
  %2213 = vmatprep.subr.mxu0 0.0
  %2214 = vmatpush2.msra.mxu0 0.0
  %2215 = vmatprep.subr.mxu0 0.0
  %2216 = vmatpush2.msra.mxu0 0.0
  %2217 = vmatprep.subr.mxu0 0.0
  %2218 = vmatpush2.msra.mxu0 0.0
  %2219 = vmatprep.subr.mxu0 0.0
  %2220 = vmatpush2.msra.mxu0 0.0
  %2221 = vmatprep.subr.mxu0 0.0
  %2222 = vmatpush2.msra.mxu0 0.0
  %2223 = vmatprep.subr.mxu0 0.0
  %2224 = vmatpush2.msra.mxu0 0.0
  %2225 = vmatprep.subr.mxu0 0.0
  %2226 = vmatpush2.msra.mxu0 0.0
  %2227 = vmatprep.mubr.f32.mxu0 0.0
  %2228 = vmatmul.mubr.f32.gmra.mxu0 %v2091
  %v2229 = vpop.f32.mrf.mxu0
  %v2230 = vadd.f32 0.0, %v2229
  %v2231 = vpop.f32.mrf.mxu0
  %2232 = vdwg.mxu0
  %2233 = vmatprep.subr.mxu0 0.0
  %2234 = vmatpush1.msra.mxu0 0.0
  %2235 = vmatprep.subr.mxu0 0.0
  %2236 = vmatpush1.msra.mxu0 0.0
  %2237 = vmatprep.subr.mxu0 0.0
  %2238 = vmatpush1.msra.mxu0 0.0
  %2239 = vmatprep.subr.mxu0 0.0
  %2240 = vmatpush1.msra.mxu0 0.0
  %2241 = vmatprep.subr.mxu0 0.0
  %2242 = vmatpush1.msra.mxu0 0.0
  %2243 = vmatprep.subr.mxu0 0.0
  %2244 = vmatpush1.msra.mxu0 0.0
  %2245 = vmatprep.subr.mxu0 0.0
  %2246 = vmatpush1.msra.mxu0 0.0
  %2247 = vmatprep.subr.mxu0 0.0
  %2248 = vmatpush1.msra.mxu0 0.0
  %2249 = vmatprep.subr.mxu0 0.0
  %2250 = vmatpush1.msra.mxu0 %v382
  %2251 = vmatprep.subr.mxu0 0.0
  %2252 = vmatpush1.msra.mxu0 %v381
  %2253 = vmatprep.subr.mxu0 0.0
  %2254 = vmatpush1.msra.mxu0 %v380
  %2255 = vmatprep.subr.mxu0 0.0
  %2256 = vmatpush1.msra.mxu0 %v379
  %2257 = vmatprep.subr.mxu0 0.0
  %2258 = vmatpush1.msra.mxu0 %v378
  %2259 = vmatprep.subr.mxu0 0.0
  %2260 = vmatpush1.msra.mxu0 %v377
  %2261 = vmatprep.subr.mxu0 0.0
  %2262 = vmatpush1.msra.mxu0 %v376
  %2263 = vmatprep.subr.mxu0 0.0
  %2264 = vmatpush1.msra.mxu0 %v375
  %2265 = vmatprep.subr.mxu0 0.0
  %2266 = vmatpush2.msra.mxu0 0.0
  %2267 = vmatprep.subr.mxu0 0.0
  %2268 = vmatpush2.msra.mxu0 0.0
  %2269 = vmatprep.subr.mxu0 0.0
  %2270 = vmatpush2.msra.mxu0 0.0
  %2271 = vmatprep.subr.mxu0 0.0
  %2272 = vmatpush2.msra.mxu0 0.0
  %2273 = vmatprep.subr.mxu0 0.0
  %2274 = vmatpush2.msra.mxu0 0.0
  %2275 = vmatprep.subr.mxu0 0.0
  %2276 = vmatpush2.msra.mxu0 0.0
  %2277 = vmatprep.subr.mxu0 0.0
  %2278 = vmatpush2.msra.mxu0 0.0
  %2279 = vmatprep.subr.mxu0 0.0
  %2280 = vmatpush2.msra.mxu0 0.0
  %2281 = vmatprep.subr.mxu0 0.0
  %2282 = vmatpush2.msra.mxu0 0.0
  %2283 = vmatprep.subr.mxu0 0.0
  %2284 = vmatpush2.msra.mxu0 0.0
  %2285 = vmatprep.subr.mxu0 0.0
  %2286 = vmatpush2.msra.mxu0 0.0
  %2287 = vmatprep.subr.mxu0 0.0
  %2288 = vmatpush2.msra.mxu0 0.0
  %2289 = vmatprep.subr.mxu0 0.0
  %2290 = vmatpush2.msra.mxu0 0.0
  %2291 = vmatprep.subr.mxu0 0.0
  %2292 = vmatpush2.msra.mxu0 0.0
  %2293 = vmatprep.subr.mxu0 0.0
  %2294 = vmatpush2.msra.mxu0 0.0
  %2295 = vmatprep.subr.mxu0 0.0
  %2296 = vmatpush2.msra.mxu0 0.0
  %2297 = vmatprep.mubr.f32.mxu0 0.0
  %2298 = vmatmul.mubr.f32.gmra.mxu0 %v2091
  %v2299 = vpop.f32.mrf.mxu0
  %v2300 = vadd.f32 %v532, %v2299
  %v2301 = vpop.f32.mrf.mxu0
  %2302 = vdwg.mxu0
  %v2304 = vrot.slane %v2160, 2
  %v2306 = vadd.f32 %v184, %v2304
  %v2307 = vxor.u32 %v2306, 2147483648
  %v2308 = vmul.f32 %v2307, 1.442695
  %v2309 = vpow.pop %v2308
  %v2310 = vadd.f32 %v2309, 1.0
  %v2311 = vrcp.pop %v2310
  %v2312 = vmul.f32 1.0, %v2311
  %v2314 = vrot.slane %v2230, 2
  %v2316 = vadd.f32 %v270, %v2314
  %v2317 = vxor.u32 %v2316, 2147483648
  %v2318 = vmul.f32 %v2317, 1.442695
  %v2319 = vpow.pop %v2318
  %v2320 = vadd.f32 %v2319, 1.0
  %v2321 = vrcp.pop %v2320
  %v2322 = vmul.f32 1.0, %v2321
  %v2324 = vrot.slane %v2300, 2
  %v2326 = vmul.f32 %v2312, %v2324
  %v2327 = vadd.f32 %v356, %v2326
  %v2328 = vtanh.pop %v2327
  %v2329 = vsub.f32 1.0, %v2322
  %v2330 = vmul.f32 %v2329, %v2328
  %v2331 = vrot.slane %v2088, 6
  %v2333 = vmul.f32 %v2322, %v2331
  %v2334 = vadd.f32 %v2330, %v2333
  %v2335 = vld [vmem:[%s11] sm:$0xff]
  %v2336 = vld [vmem:[%s11 + $0x8] sm:$0xff]
  %v2337 = vld [vmem:[%s11 + $0x10] sm:$0xff]
  %v2338 = vld [vmem:[%s11 + $0x18] sm:$0xff]
  %v2339 = vld [vmem:[%s11 + $0x20] sm:$0xff]
  %v2340 = vld [vmem:[%s11 + $0x28] sm:$0xff]
  %v2341 = vld [vmem:[%s11 + $0x30] sm:$0xff]
  %v2342 = vld [vmem:[%s11 + $0x38] sm:$0xff]
  %v2343 = vld [vmem:[#allocation2] sm:$0x1]
  %v2345 = vlaneseq
  %v2346 = vshrl.u32 %v2345, 7
  %v2347 = vsub.s32 0, %v2346
  %v2348 = vrot.slane %v2343, %v2347
  %v2351 = vrot.slane %v2334, 6
  %v2352 = vsel %vm384, %v2351, 0
  %2354 = vmatprep.subr.mxu0 0.0
  %2355 = vmatpush1.msra.mxu0 0.0
  %2356 = vmatprep.subr.mxu0 0.0
  %2357 = vmatpush1.msra.mxu0 0.0
  %2358 = vmatprep.subr.mxu0 0.0
  %2359 = vmatpush1.msra.mxu0 0.0
  %2360 = vmatprep.subr.mxu0 0.0
  %2361 = vmatpush1.msra.mxu0 0.0
  %2362 = vmatprep.subr.mxu0 0.0
  %2363 = vmatpush1.msra.mxu0 0.0
  %2364 = vmatprep.subr.mxu0 0.0
  %2365 = vmatpush1.msra.mxu0 0.0
  %2366 = vmatprep.subr.mxu0 0.0
  %2367 = vmatpush1.msra.mxu0 0.0
  %2368 = vmatprep.subr.mxu0 0.0
  %2369 = vmatpush1.msra.mxu0 0.0
  %2370 = vmatprep.subr.mxu0 0.0
  %2371 = vmatpush1.msra.mxu0 %v2342
  %2372 = vmatprep.subr.mxu0 0.0
  %2373 = vmatpush1.msra.mxu0 %v2341
  %2374 = vmatprep.subr.mxu0 0.0
  %2375 = vmatpush1.msra.mxu0 %v2340
  %2376 = vmatprep.subr.mxu0 0.0
  %2377 = vmatpush1.msra.mxu0 %v2339
  %2378 = vmatprep.subr.mxu0 0.0
  %2379 = vmatpush1.msra.mxu0 %v2338
  %2380 = vmatprep.subr.mxu0 0.0
  %2381 = vmatpush1.msra.mxu0 %v2337
  %2382 = vmatprep.subr.mxu0 0.0
  %2383 = vmatpush1.msra.mxu0 %v2336
  %2384 = vmatprep.subr.mxu0 0.0
  %2385 = vmatpush1.msra.mxu0 %v2335
  %2386 = vmatprep.subr.mxu0 0.0
  %2387 = vmatpush2.msra.mxu0 0.0
  %2388 = vmatprep.subr.mxu0 0.0
  %2389 = vmatpush2.msra.mxu0 0.0
  %2390 = vmatprep.subr.mxu0 0.0
  %2391 = vmatpush2.msra.mxu0 0.0
  %2392 = vmatprep.subr.mxu0 0.0
  %2393 = vmatpush2.msra.mxu0 0.0
  %2394 = vmatprep.subr.mxu0 0.0
  %2395 = vmatpush2.msra.mxu0 0.0
  %2396 = vmatprep.subr.mxu0 0.0
  %2397 = vmatpush2.msra.mxu0 0.0
  %2398 = vmatprep.subr.mxu0 0.0
  %2399 = vmatpush2.msra.mxu0 0.0
  %2400 = vmatprep.subr.mxu0 0.0
  %2401 = vmatpush2.msra.mxu0 0.0
  %2402 = vmatprep.subr.mxu0 0.0
  %2403 = vmatpush2.msra.mxu0 0.0
  %2404 = vmatprep.subr.mxu0 0.0
  %2405 = vmatpush2.msra.mxu0 0.0
  %2406 = vmatprep.subr.mxu0 0.0
  %2407 = vmatpush2.msra.mxu0 0.0
  %2408 = vmatprep.subr.mxu0 0.0
  %2409 = vmatpush2.msra.mxu0 0.0
  %2410 = vmatprep.subr.mxu0 0.0
  %2411 = vmatpush2.msra.mxu0 0.0
  %2412 = vmatprep.subr.mxu0 0.0
  %2413 = vmatpush2.msra.mxu0 0.0
  %2414 = vmatprep.subr.mxu0 0.0
  %2415 = vmatpush2.msra.mxu0 0.0
  %2416 = vmatprep.subr.mxu0 0.0
  %2417 = vmatpush2.msra.mxu0 0.0
  %2418 = vmatprep.mubr.f32.mxu0 0.0
  %2419 = vmatmul.mubr.f32.gmra.mxu0 %v2352
  %v2420 = vpop.f32.mrf.mxu0
  %v2421 = vadd.f32 %v2348, %v2420
  %v2422 = vpop.f32.mrf.mxu0
  %2423 = vdwg.mxu0
  %vm2424 = vcmask 1024
  %v2425 = vsel %vm2424, %v2421, -inf
  %v2426 = vrot.slane %v2425, 4
  %v2427 = vmax.f32 %v2425, %v2426
  %v2428 = vrot.slane %v2427, 2
  %v2429 = vmax.f32 %v2427, %v2428
  %v2430 = vrot.slane %v2429, 1
  %v2431 = vmax.f32 %v2429, %v2430
  %v2432 = vsub.f32 %v2421, %v2431
  %v2433 = vmul.f32 %v2432, 1.442695
  %v2434 = vpow.pop %v2433
  %v2435 = vsel %vm2424, %v2434, 0.0
  %v2436 = vrot.slane %v2435, 4
  %v2437 = vadd.f32 %v2435, %v2436
  %v2438 = vrot.slane %v2437, 2
  %v2439 = vadd.f32 %v2437, %v2438
  %v2440 = vrot.slane %v2439, 1
  %v2441 = vadd.f32 %v2439, %v2440
  %v2442 = vrcp.pop %v2441
  %v2443 = vmul.f32 %v2434, %v2442
  %2444 = vst.msk [vmem:[%s13] sm:$0x3] %vm2424, %v2443
  // Predicated region
  $region54: #{recurrent_network_forward.1} parent=0 // pred_check
    _
  $region55: #{recurrent_network_forward.1} parent=0 // pred_check_branch
    %2446 = sbr.rel (0) target = $region57
  $region56: #{recurrent_network_forward.1} parent=0 // pred_region
    _
  $region57: #{recurrent_network_forward.1} parent=0 // pred_fallthru
    _
  // Predicated region
  $region58: #{recurrent_network_forward.1} parent=0 // pred_check
    _
  $region59: #{recurrent_network_forward.1} parent=0 // pred_check_branch
    %2448 = sbr.rel (0) target = $region61
  $region60: #{recurrent_network_forward.1} parent=0 // pred_region
    _
  $region61: #{recurrent_network_forward.1} parent=0 // pred_fallthru
    _

</llo_original>
